<compile_context>
chip_gen: v5e
topology: v5e:2x2
jax: 0.10.0
libtpu: 0.0.40
codegen_flags: <defaults>
</compile_context>

<pallas_src>
import jax
import jax.numpy as jnp
from jax import lax
from jax.experimental import pallas as pl
from jax.experimental.pallas import tpu as pltpu

CHUNK = 8     # timesteps per grid step (sublane-dense gi / out blocks)
LANE = 128    # TPU lane width


def _round_up(x, m):
    return ((x + m - 1) // m) * m


def gru_chunk_kernel(seq_len_ref, gi_ref, h0_ref, whh_ref, bhh_ref,
                     out_ref, hn_ref):
    """One CHUNK-step slice of the GRU recurrence (batch=1, gate order r, z, n).

    seq_len_ref: SMEM (1,) int32    true sequence length (runtime)
    gi_ref:  (CHUNK, 3*Hp)  hoisted input projection for this chunk (pipelined)
    h0_ref:  (1, Hp)        initial hidden (resident)
    whh_ref: (Hp, 3*Hp)     W_hh^T, per-gate lane-padded (resident)
    bhh_ref: (1, 3*Hp)      b_hh, per-gate lane-padded (resident)
    out_ref: (CHUNK, Hp)    per-step hidden states for this chunk (pipelined)
    hn_ref:  (1, Hp)        carried / final hidden state (resident accumulator)
    """
    c = pl.program_id(0)
    Hp = hn_ref.shape[-1]
    seq_len = seq_len_ref[0]

    @pl.when(c == 0)
    def _():
        hn_ref[...] = h0_ref[...]

    w_hh = whh_ref[...]              # (Hp, 3*Hp)
    b_hh = bhh_ref[...]              # (1, 3*Hp)
    h = hn_ref[...]                  # (1, Hp) carried hidden
    base = c * CHUNK

    # Bounded 8-step unroll per grid step (the grid axis bounds code size/live ranges).
    for i in range(CHUNK):
        gi_t = gi_ref[i:i + 1, :]                                        # (1, 3*Hp)
        # TODO(synk): for large H on v6e/v7x cast h / w_hh to bf16 for this matmul
        # (keep preferred_element_type=f32 and all gate math in f32); for H >= 256
        # hold W_hh in MXU staging via pltpu.matmul_push_rhs / matmul_acc_lhs.
        gh = jnp.dot(h, w_hh, preferred_element_type=jnp.float32) + b_hh  # (1, 3*Hp)

        rz = jax.nn.sigmoid(gi_t[:, :2 * Hp] + gh[:, :2 * Hp])   # fused r/z sigmoid
        r = rz[:, :Hp]
        z = rz[:, Hp:]
        n = jnp.tanh(gi_t[:, 2 * Hp:] + r * gh[:, 2 * Hp:])
        h_new = (1.0 - z) * n + z * h                              # (1, Hp)

        out_ref[i:i + 1, :] = h_new
        # Padded tail steps (t >= seq_len) must not advance the carried hidden state.
        m = ((base + i) < seq_len).astype(jnp.float32)             # scalar 0/1 blend
        h = h + m * (h_new - h)

    hn_ref[...] = h


@jax.jit
def _encoder_gru_bucketed(tokens_pad, seq_len, hidden, emb_w, w_ih_t, w_hh_t,
                          b_ih, b_hh):
    """GRU forward on a length-bucketed token array.

    tokens_pad: (S_max,) int32, S_max a multiple of CHUNK
    seq_len:    (1,) int32 true length (runtime, no recompile per length)
    hidden:     (1, 1, H) f32
    w_ih_t:     (E, 3H) = W_ih^T ;  w_hh_t: (H, 3H) = W_hh^T   (gate order r, z, n)
    Returns out (S_max, H), hn (1, H); rows >= seq_len of `out` are junk.
    """
    S_max = tokens_pad.shape[0]
    H = w_hh_t.shape[0]
    Hp = _round_up(H, LANE)
    pad = Hp - H

    # Embedding gather + hoisted input projection: dense XLA ops, off the serial path.
    # TODO(synk): for large vocab keep emb_w in HBM (memory_space=pl.ANY) and gather
    # rows inside the kernel via scalar-prefetched tokens instead.
    x = jnp.take(emb_w, tokens_pad, axis=0).astype(jnp.float32)          # (S_max, E)
    gi = x @ w_ih_t + b_ih                                               # (S_max, 3H)

    # Lane-pad each per-gate block of H to Hp (multiple of 128): lane-dense kernel.
    gi_p = jnp.pad(gi.reshape(S_max, 3, H),
                   ((0, 0), (0, 0), (0, pad))).reshape(S_max, 3 * Hp)
    whh_p = jnp.pad(w_hh_t.reshape(H, 3, H),
                    ((0, pad), (0, 0), (0, pad))).reshape(Hp, 3 * Hp)
    bhh_p = jnp.pad(b_hh.reshape(3, H), ((0, 0), (0, pad))).reshape(1, 3 * Hp)
    h0_p = jnp.pad(hidden.reshape(1, H), ((0, 0), (0, pad)))             # (1, Hp)

    grid_spec = pltpu.PrefetchScalarGridSpec(
        num_scalar_prefetch=1,
        grid=(S_max // CHUNK,),
        in_specs=[
            pl.BlockSpec((CHUNK, 3 * Hp), lambda c, sl: (c, 0)),  # gi (streamed)
            pl.BlockSpec((1, Hp), lambda c, sl: (0, 0)),          # h0 (resident)
            pl.BlockSpec((Hp, 3 * Hp), lambda c, sl: (0, 0)),     # W_hh^T (resident)
            pl.BlockSpec((1, 3 * Hp), lambda c, sl: (0, 0)),      # b_hh (resident)
        ],
        out_specs=(
            pl.BlockSpec((CHUNK, Hp), lambda c, sl: (c, 0)),      # per-step hidden
            pl.BlockSpec((1, Hp), lambda c, sl: (0, 0)),          # final hidden
        ),
    )

    out_p, hn_p = pl.pallas_call(
        gru_chunk_kernel,
        grid_spec=grid_spec,
        out_shape=(
            jax.ShapeDtypeStruct((S_max, Hp), jnp.float32),
            jax.ShapeDtypeStruct((1, Hp), jnp.float32),
        ),
        compiler_params=pltpu.CompilerParams(
            dimension_semantics=("arbitrary",)),                  # serial recurrence
    )(seq_len, gi_p, h0_p, whh_p, bhh_p)

    return out_p[:, :H], hn_p[:, :H]


def encoder_rnn_forward(tokens, hidden, emb_w, w_ih_t, w_hh_t, b_ih, b_hh):
    """Mirrors EncoderRNN.forward(input, hidden) for batch=1, unidirectional GRU.

    tokens: (S,) int32 (PyTorch input (S, 1) with batch dim squeezed)
    hidden: (1, 1, H) f32
    Weights are pre-transposed once at load time: w_ih_t=(E,3H), w_hh_t=(H,3H).
    Returns (output (S, 1, H), hidden (1, 1, H)).
    """
    S = int(tokens.shape[0])
    H = hidden.shape[-1]
    # Bucket length to the next power of two (>= CHUNK): one compile per bucket, the
    # true length is a runtime scalar.
    S_max = max(CHUNK, pl.next_power_of_2(S))
    tokens_pad = jnp.pad(tokens, (0, S_max - S))
    seq_len = jnp.array([S], dtype=jnp.int32)

    out, hn = _encoder_gru_bucketed(tokens_pad, seq_len, hidden, emb_w,
                                    w_ih_t, w_hh_t, b_ih, b_hh)
    output = out[:S].reshape(S, 1, H)       # (seq, batch=1, H), like PyTorch GRU output
    hidden_out = hn.reshape(1, 1, H)        # hidden.view(1, 1, out_size)
    return output, hidden_out

# TODO(synk): bidirectional=True variant (reverse pass + concat) not implemented; on
# v7x the two directions would go on the two TensorCores (leading parallel grid axis).


def _reference_forward(tokens, hidden, emb_w, w_ih_t, w_hh_t, b_ih, b_hh):
    """Pure-JAX reference of embedding + PyTorch-style GRU (gate order r, z, n)."""
    H = hidden.shape[-1]
    x = jnp.take(emb_w, tokens, axis=0).astype(jnp.float32)
    h = hidden.reshape(1, H)

    def step(h, x_t):
        gi = x_t[None, :] @ w_ih_t + b_ih
        gh = h @ w_hh_t + b_hh
        r = jax.nn.sigmoid(gi[:, :H] + gh[:, :H])
        z = jax.nn.sigmoid(gi[:, H:2 * H] + gh[:, H:2 * H])
        n = jnp.tanh(gi[:, 2 * H:] + r * gh[:, 2 * H:])
        h_new = (1.0 - z) * n + z * h
        return h_new, h_new[0]

    h_fin, outs = lax.scan(step, h, x)
    return outs[:, None, :], h_fin.reshape(1, 1, H)


if __name__ == "__main__":
    VOCAB, E, H = 16, 32, 32            # input_size, embedding_dims, hidden_size
    key = jax.random.PRNGKey(0)
    k_emb, k_wih, k_whh, k_bih, k_bhh, k_tok = jax.random.split(key, 6)

    bound = 1.0 / jnp.sqrt(jnp.float32(H))
    emb_w = jax.random.normal(k_emb, (VOCAB, E), dtype=jnp.float32)
    w_ih = jax.random.uniform(k_wih, (3 * H, E), minval=-bound, maxval=bound, dtype=jnp.float32)
    w_hh = jax.random.uniform(k_whh, (3 * H, H), minval=-bound, maxval=bound, dtype=jnp.float32)
    b_ih = jax.random.uniform(k_bih, (3 * H,), minval=-bound, maxval=bound, dtype=jnp.float32)
    b_hh = jax.random.uniform(k_bhh, (3 * H,), minval=-bound, maxval=bound, dtype=jnp.float32)

    # Pre-transpose once at parameter-load time (no per-call transposes).
    w_ih_t = jnp.asarray(w_ih.T)        # (E, 3H)
    w_hh_t = jnp.asarray(w_hh.T)        # (H, 3H)

    h0 = jnp.zeros((1, 1, H), dtype=jnp.float32)     # EncoderRNN.initHidden()

    # Two lengths in the same bucket (16): second call reuses the compiled executable
    # and exercises the runtime seq_len masking of padded steps.
    for S in (13, 10):
        tokens = jax.random.randint(jax.random.fold_in(k_tok, S), (S,), 0, VOCAB,
                                    dtype=jnp.int32)
        out, hid = encoder_rnn_forward(tokens, h0, emb_w, w_ih_t, w_hh_t, b_ih, b_hh)
        out = jax.block_until_ready(out)
        hid = jax.block_until_ready(hid)
        assert out.shape == (S, 1, H), out.shape
        assert hid.shape == (1, 1, H), hid.shape

        ref_out, ref_hid = _reference_forward(tokens, h0, emb_w, w_ih_t, w_hh_t, b_ih, b_hh)
        assert jnp.allclose(out, ref_out, rtol=2e-2, atol=2e-2), f"output mismatch (S={S})"
        assert jnp.allclose(hid, ref_hid, rtol=2e-2, atol=2e-2), f"hidden mismatch (S={S})"

    print("KERNEL_OK")
</pallas_src>

<mosaic_0001>
module attributes {stable_mosaic.version = 11 : i64} {
  func.func @gru_chunk_kernel(%arg0: i32, %arg1: memref<1xi32, #tpu.memory_space<smem>>, %arg2: memref<8x384xf32, #tpu.memory_space<vmem>>, %arg3: memref<1x128xf32, #tpu.memory_space<vmem>>, %arg4: memref<128x384xf32, #tpu.memory_space<vmem>>, %arg5: memref<1x384xf32, #tpu.memory_space<vmem>>, %arg6: memref<8x128xf32, #tpu.memory_space<vmem>>, %arg7: memref<1x128xf32, #tpu.memory_space<vmem>>) attributes {dimension_semantics = [#tpu.dimension_semantics<arbitrary>], iteration_bounds = array<i64: 2>, scalar_prefetch = 1 : i64, scratch_operands = 0 : i64, tpu.core_type = #tpu.core_type<tc>, window_params = [{transform_indices = @transform_0, window_bounds = array<i64: 8, 384>}, {pipeline_mode = #tpu.pipeline_mode<synchronous>, transform_indices = @transform_1, window_bounds = array<i64: 1, 128>}, {pipeline_mode = #tpu.pipeline_mode<synchronous>, transform_indices = @transform_2, window_bounds = array<i64: 128, 384>}, {pipeline_mode = #tpu.pipeline_mode<synchronous>, transform_indices = @transform_3, window_bounds = array<i64: 1, 384>}, {transform_indices = @transform_4, window_bounds = array<i64: 8, 128>}, {pipeline_mode = #tpu.pipeline_mode<synchronous>, transform_indices = @transform_5, window_bounds = array<i64: 1, 128>}]} {
    %c0 = arith.constant 0 : index
    %0 = memref.load %arg1[%c0] : memref<1xi32, #tpu.memory_space<smem>>
    %c0_i32 = arith.constant 0 : i32
    %1 = arith.cmpi eq, %arg0, %c0_i32 : i32
    %2 = arith.extui %1 : i1 to i32
    %c0_i32_0 = arith.constant 0 : i32
    %3 = arith.cmpi ne, %2, %c0_i32_0 : i32
    scf.if %3 {
      %c0_58 = arith.constant 0 : index
      %c0_59 = arith.constant 0 : index
      %265 = vector.load %arg3[%c0_58, %c0_59] : memref<1x128xf32, #tpu.memory_space<vmem>>, vector<1x128xf32>
      %c0_60 = arith.constant 0 : index
      %c0_61 = arith.constant 0 : index
      %266 = vector.load %arg7[%c0_60, %c0_61] : memref<1x128xf32, #tpu.memory_space<vmem>>, vector<1x128xf32>
      tpu.vector_store %arg7[%c0_60, %c0_61], %265 {strides = array<i32>} : memref<1x128xf32, #tpu.memory_space<vmem>>, vector<1x128xf32>,
    } else {
    }
    %c0_1 = arith.constant 0 : index
    %c0_2 = arith.constant 0 : index
    %4 = vector.load %arg4[%c0_1, %c0_2] : memref<128x384xf32, #tpu.memory_space<vmem>>, vector<128x384xf32>
    %c0_3 = arith.constant 0 : index
    %c0_4 = arith.constant 0 : index
    %5 = vector.load %arg5[%c0_3, %c0_4] : memref<1x384xf32, #tpu.memory_space<vmem>>, vector<1x384xf32>
    %c0_5 = arith.constant 0 : index
    %c0_6 = arith.constant 0 : index
    %6 = vector.load %arg7[%c0_5, %c0_6] : memref<1x128xf32, #tpu.memory_space<vmem>>, vector<1x128xf32>
    %c8_i32 = arith.constant 8 : i32
    %7 = arith.muli %arg0, %c8_i32 : i32
    %c0_7 = arith.constant 0 : index
    %c0_8 = arith.constant 0 : index
    %8 = vector.load %arg2[%c0_7, %c0_8] : memref<8x384xf32, #tpu.memory_space<vmem>>, vector<1x384xf32>
    %cst = arith.constant dense<0.000000e+00> : vector<1x384xf32>
    %9 = tpu.matmul %6, %4, %cst {dimension_numbers = #tpu.dot_dimension_numbers<[1], [0], [0], [1], [0, 0, 1, 1], [], []>} : vector<1x128xf32>, vector<128x384xf32>, vector<1x384xf32> -> vector<1x384xf32>
    %10 = arith.addf %9, %5 : vector<1x384xf32>
    %11 = vector.extract_strided_slice %8 {offsets = [0, 0], sizes = [1, 256], strides = [1, 1]} : vector<1x384xf32> to vector<1x256xf32>
    %12 = vector.extract_strided_slice %10 {offsets = [0, 0], sizes = [1, 256], strides = [1, 1]} : vector<1x384xf32> to vector<1x256xf32>
    %13 = arith.addf %11, %12 : vector<1x256xf32>
    %14 = arith.negf %13 : vector<1x256xf32>
    %15 = math.exp %14 : vector<1x256xf32>
    %cst_9 = arith.constant 1.000000e+00 : f32
    %16 = vector.broadcast %cst_9 : f32 to vector<1x256xf32>
    %17 = arith.addf %16, %15 : vector<1x256xf32>
    %18 = arith.divf %16, %17 : vector<1x256xf32>
    %19 = vector.extract_strided_slice %18 {offsets = [0, 0], sizes = [1, 128], strides = [1, 1]} : vector<1x256xf32> to vector<1x128xf32>
    %20 = vector.extract_strided_slice %18 {offsets = [0, 128], sizes = [1, 128], strides = [1, 1]} : vector<1x256xf32> to vector<1x128xf32>
    %21 = vector.extract_strided_slice %8 {offsets = [0, 256], sizes = [1, 128], strides = [1, 1]} : vector<1x384xf32> to vector<1x128xf32>
    %22 = vector.extract_strided_slice %10 {offsets = [0, 256], sizes = [1, 128], strides = [1, 1]} : vector<1x384xf32> to vector<1x128xf32>
    %23 = arith.mulf %19, %22 : vector<1x128xf32>
    %24 = arith.addf %21, %23 : vector<1x128xf32>
    %25 = math.tanh %24 : vector<1x128xf32>
    %cst_10 = arith.constant 1.000000e+00 : f32
    %26 = vector.broadcast %cst_10 : f32 to vector<1x128xf32>
    %27 = arith.subf %26, %20 : vector<1x128xf32>
    %28 = arith.mulf %27, %25 : vector<1x128xf32>
    %29 = arith.mulf %20, %6 : vector<1x128xf32>
    %30 = arith.addf %28, %29 : vector<1x128xf32>
    %c0_11 = arith.constant 0 : index
    %c0_12 = arith.constant 0 : index
    %31 = vector.load %arg6[%c0_11, %c0_12] : memref<8x128xf32, #tpu.memory_space<vmem>>, vector<1x128xf32>
    tpu.vector_store %arg6[%c0_11, %c0_12], %30 {strides = array<i32>} : memref<8x128xf32, #tpu.memory_space<vmem>>, vector<1x128xf32>,
    %c0_i32_13 = arith.constant 0 : i32
    %32 = arith.addi %7, %c0_i32_13 : i32
    %33 = arith.cmpi slt, %32, %0 : i32
    %34 = arith.extui %33 : i1 to i32
    %35 = arith.sitofp %34 : i32 to f32
    %36 = arith.subf %30, %6 : vector<1x128xf32>
    %37 = vector.broadcast %35 : f32 to vector<1x128xf32>
    %38 = arith.mulf %37, %36 : vector<1x128xf32>
    %39 = arith.addf %6, %38 : vector<1x128xf32>
    %c1 = arith.constant 1 : index
    %c0_14 = arith.constant 0 : index
    %40 = vector.load %arg2[%c1, %c0_14] : memref<8x384xf32, #tpu.memory_space<vmem>>, vector<1x384xf32>
    %cst_15 = arith.constant dense<0.000000e+00> : vector<1x384xf32>
    %41 = tpu.matmul %39, %4, %cst_15 {dimension_numbers = #tpu.dot_dimension_numbers<[1], [0], [0], [1], [0, 0, 1, 1], [], []>} : vector<1x128xf32>, vector<128x384xf32>, vector<1x384xf32> -> vector<1x384xf32>
    %42 = arith.addf %41, %5 : vector<1x384xf32>
    %43 = vector.extract_strided_slice %40 {offsets = [0, 0], sizes = [1, 256], strides = [1, 1]} : vector<1x384xf32> to vector<1x256xf32>
    %44 = vector.extract_strided_slice %42 {offsets = [0, 0], sizes = [1, 256], strides = [1, 1]} : vector<1x384xf32> to vector<1x256xf32>
    %45 = arith.addf %43, %44 : vector<1x256xf32>
    %46 = arith.negf %45 : vector<1x256xf32>
    %47 = math.exp %46 : vector<1x256xf32>
    %cst_16 = arith.constant 1.000000e+00 : f32
    %48 = vector.broadcast %cst_16 : f32 to vector<1x256xf32>
    %49 = arith.addf %48, %47 : vector<1x256xf32>
    %50 = arith.divf %48, %49 : vector<1x256xf32>
    %51 = vector.extract_strided_slice %50 {offsets = [0, 0], sizes = [1, 128], strides = [1, 1]} : vector<1x256xf32> to vector<1x128xf32>
    %52 = vector.extract_strided_slice %50 {offsets = [0, 128], sizes = [1, 128], strides = [1, 1]} : vector<1x256xf32> to vector<1x128xf32>
    %53 = vector.extract_strided_slice %40 {offsets = [0, 256], sizes = [1, 128], strides = [1, 1]} : vector<1x384xf32> to vector<1x128xf32>
    %54 = vector.extract_strided_slice %42 {offsets = [0, 256], sizes = [1, 128], strides = [1, 1]} : vector<1x384xf32> to vector<1x128xf32>
    %55 = arith.mulf %51, %54 : vector<1x128xf32>
    %56 = arith.addf %53, %55 : vector<1x128xf32>
    %57 = math.tanh %56 : vector<1x128xf32>
    %cst_17 = arith.constant 1.000000e+00 : f32
    %58 = vector.broadcast %cst_17 : f32 to vector<1x128xf32>
    %59 = arith.subf %58, %52 : vector<1x128xf32>
    %60 = arith.mulf %59, %57 : vector<1x128xf32>
    %61 = arith.mulf %52, %39 : vector<1x128xf32>
    %62 = arith.addf %60, %61 : vector<1x128xf32>
    %c1_18 = arith.constant 1 : index
    %c0_19 = arith.constant 0 : index
    %63 = vector.load %arg6[%c1_18, %c0_19] : memref<8x128xf32, #tpu.memory_space<vmem>>, vector<1x128xf32>
    tpu.vector_store %arg6[%c1_18, %c0_19], %62 {strides = array<i32>} : memref<8x128xf32, #tpu.memory_space<vmem>>, vector<1x128xf32>,
    %c1_i32 = arith.constant 1 : i32
    %64 = arith.addi %7, %c1_i32 : i32
    %65 = arith.cmpi slt, %64, %0 : i32
    %66 = arith.extui %65 : i1 to i32
    %67 = arith.sitofp %66 : i32 to f32
    %68 = arith.subf %62, %39 : vector<1x128xf32>
    %69 = vector.broadcast %67 : f32 to vector<1x128xf32>
    %70 = arith.mulf %69, %68 : vector<1x128xf32>
    %71 = arith.addf %39, %70 : vector<1x128xf32>
    %c2 = arith.constant 2 : index
    %c0_20 = arith.constant 0 : index
    %72 = vector.load %arg2[%c2, %c0_20] : memref<8x384xf32, #tpu.memory_space<vmem>>, vector<1x384xf32>
    %cst_21 = arith.constant dense<0.000000e+00> : vector<1x384xf32>
    %73 = tpu.matmul %71, %4, %cst_21 {dimension_numbers = #tpu.dot_dimension_numbers<[1], [0], [0], [1], [0, 0, 1, 1], [], []>} : vector<1x128xf32>, vector<128x384xf32>, vector<1x384xf32> -> vector<1x384xf32>
    %74 = arith.addf %73, %5 : vector<1x384xf32>
    %75 = vector.extract_strided_slice %72 {offsets = [0, 0], sizes = [1, 256], strides = [1, 1]} : vector<1x384xf32> to vector<1x256xf32>
    %76 = vector.extract_strided_slice %74 {offsets = [0, 0], sizes = [1, 256], strides = [1, 1]} : vector<1x384xf32> to vector<1x256xf32>
    %77 = arith.addf %75, %76 : vector<1x256xf32>
    %78 = arith.negf %77 : vector<1x256xf32>
    %79 = math.exp %78 : vector<1x256xf32>
    %cst_22 = arith.constant 1.000000e+00 : f32
    %80 = vector.broadcast %cst_22 : f32 to vector<1x256xf32>
    %81 = arith.addf %80, %79 : vector<1x256xf32>
    %82 = arith.divf %80, %81 : vector<1x256xf32>
    %83 = vector.extract_strided_slice %82 {offsets = [0, 0], sizes = [1, 128], strides = [1, 1]} : vector<1x256xf32> to vector<1x128xf32>
    %84 = vector.extract_strided_slice %82 {offsets = [0, 128], sizes = [1, 128], strides = [1, 1]} : vector<1x256xf32> to vector<1x128xf32>
    %85 = vector.extract_strided_slice %72 {offsets = [0, 256], sizes = [1, 128], strides = [1, 1]} : vector<1x384xf32> to vector<1x128xf32>
    %86 = vector.extract_strided_slice %74 {offsets = [0, 256], sizes = [1, 128], strides = [1, 1]} : vector<1x384xf32> to vector<1x128xf32>
    %87 = arith.mulf %83, %86 : vector<1x128xf32>
    %88 = arith.addf %85, %87 : vector<1x128xf32>
    %89 = math.tanh %88 : vector<1x128xf32>
    %cst_23 = arith.constant 1.000000e+00 : f32
    %90 = vector.broadcast %cst_23 : f32 to vector<1x128xf32>
    %91 = arith.subf %90, %84 : vector<1x128xf32>
    %92 = arith.mulf %91, %89 : vector<1x128xf32>
    %93 = arith.mulf %84, %71 : vector<1x128xf32>
    %94 = arith.addf %92, %93 : vector<1x128xf32>
    %c2_24 = arith.constant 2 : index
    %c0_25 = arith.constant 0 : index
    %95 = vector.load %arg6[%c2_24, %c0_25] : memref<8x128xf32, #tpu.memory_space<vmem>>, vector<1x128xf32>
    tpu.vector_store %arg6[%c2_24, %c0_25], %94 {strides = array<i32>} : memref<8x128xf32, #tpu.memory_space<vmem>>, vector<1x128xf32>,
    %c2_i32 = arith.constant 2 : i32
    %96 = arith.addi %7, %c2_i32 : i32
    %97 = arith.cmpi slt, %96, %0 : i32
    %98 = arith.extui %97 : i1 to i32
    %99 = arith.sitofp %98 : i32 to f32
    %100 = arith.subf %94, %71 : vector<1x128xf32>
    %101 = vector.broadcast %99 : f32 to vector<1x128xf32>
    %102 = arith.mulf %101, %100 : vector<1x128xf32>
    %103 = arith.addf %71, %102 : vector<1x128xf32>
    %c3 = arith.constant 3 : index
    %c0_26 = arith.constant 0 : index
    %104 = vector.load %arg2[%c3, %c0_26] : memref<8x384xf32, #tpu.memory_space<vmem>>, vector<1x384xf32>
    %cst_27 = arith.constant dense<0.000000e+00> : vector<1x384xf32>
    %105 = tpu.matmul %103, %4, %cst_27 {dimension_numbers = #tpu.dot_dimension_numbers<[1], [0], [0], [1], [0, 0, 1, 1], [], []>} : vector<1x128xf32>, vector<128x384xf32>, vector<1x384xf32> -> vector<1x384xf32>
    %106 = arith.addf %105, %5 : vector<1x384xf32>
    %107 = vector.extract_strided_slice %104 {offsets = [0, 0], sizes = [1, 256], strides = [1, 1]} : vector<1x384xf32> to vector<1x256xf32>
    %108 = vector.extract_strided_slice %106 {offsets = [0, 0], sizes = [1, 256], strides = [1, 1]} : vector<1x384xf32> to vector<1x256xf32>
    %109 = arith.addf %107, %108 : vector<1x256xf32>
    %110 = arith.negf %109 : vector<1x256xf32>
    %111 = math.exp %110 : vector<1x256xf32>
    %cst_28 = arith.constant 1.000000e+00 : f32
    %112 = vector.broadcast %cst_28 : f32 to vector<1x256xf32>
    %113 = arith.addf %112, %111 : vector<1x256xf32>
    %114 = arith.divf %112, %113 : vector<1x256xf32>
    %115 = vector.extract_strided_slice %114 {offsets = [0, 0], sizes = [1, 128], strides = [1, 1]} : vector<1x256xf32> to vector<1x128xf32>
    %116 = vector.extract_strided_slice %114 {offsets = [0, 128], sizes = [1, 128], strides = [1, 1]} : vector<1x256xf32> to vector<1x128xf32>
    %117 = vector.extract_strided_slice %104 {offsets = [0, 256], sizes = [1, 128], strides = [1, 1]} : vector<1x384xf32> to vector<1x128xf32>
    %118 = vector.extract_strided_slice %106 {offsets = [0, 256], sizes = [1, 128], strides = [1, 1]} : vector<1x384xf32> to vector<1x128xf32>
    %119 = arith.mulf %115, %118 : vector<1x128xf32>
    %120 = arith.addf %117, %119 : vector<1x128xf32>
    %121 = math.tanh %120 : vector<1x128xf32>
    %cst_29 = arith.constant 1.000000e+00 : f32
    %122 = vector.broadcast %cst_29 : f32 to vector<1x128xf32>
    %123 = arith.subf %122, %116 : vector<1x128xf32>
    %124 = arith.mulf %123, %121 : vector<1x128xf32>
    %125 = arith.mulf %116, %103 : vector<1x128xf32>
    %126 = arith.addf %124, %125 : vector<1x128xf32>
    %c3_30 = arith.constant 3 : index
    %c0_31 = arith.constant 0 : index
    %127 = vector.load %arg6[%c3_30, %c0_31] : memref<8x128xf32, #tpu.memory_space<vmem>>, vector<1x128xf32>
    tpu.vector_store %arg6[%c3_30, %c0_31], %126 {strides = array<i32>} : memref<8x128xf32, #tpu.memory_space<vmem>>, vector<1x128xf32>,
    %c3_i32 = arith.constant 3 : i32
    %128 = arith.addi %7, %c3_i32 : i32
    %129 = arith.cmpi slt, %128, %0 : i32
    %130 = arith.extui %129 : i1 to i32
    %131 = arith.sitofp %130 : i32 to f32
    %132 = arith.subf %126, %103 : vector<1x128xf32>
    %133 = vector.broadcast %131 : f32 to vector<1x128xf32>
    %134 = arith.mulf %133, %132 : vector<1x128xf32>
    %135 = arith.addf %103, %134 : vector<1x128xf32>
    %c4 = arith.constant 4 : index
    %c0_32 = arith.constant 0 : index
    %136 = vector.load %arg2[%c4, %c0_32] : memref<8x384xf32, #tpu.memory_space<vmem>>, vector<1x384xf32>
    %cst_33 = arith.constant dense<0.000000e+00> : vector<1x384xf32>
    %137 = tpu.matmul %135, %4, %cst_33 {dimension_numbers = #tpu.dot_dimension_numbers<[1], [0], [0], [1], [0, 0, 1, 1], [], []>} : vector<1x128xf32>, vector<128x384xf32>, vector<1x384xf32> -> vector<1x384xf32>
    %138 = arith.addf %137, %5 : vector<1x384xf32>
    %139 = vector.extract_strided_slice %136 {offsets = [0, 0], sizes = [1, 256], strides = [1, 1]} : vector<1x384xf32> to vector<1x256xf32>
    %140 = vector.extract_strided_slice %138 {offsets = [0, 0], sizes = [1, 256], strides = [1, 1]} : vector<1x384xf32> to vector<1x256xf32>
    %141 = arith.addf %139, %140 : vector<1x256xf32>
    %142 = arith.negf %141 : vector<1x256xf32>
    %143 = math.exp %142 : vector<1x256xf32>
    %cst_34 = arith.constant 1.000000e+00 : f32
    %144 = vector.broadcast %cst_34 : f32 to vector<1x256xf32>
    %145 = arith.addf %144, %143 : vector<1x256xf32>
    %146 = arith.divf %144, %145 : vector<1x256xf32>
    %147 = vector.extract_strided_slice %146 {offsets = [0, 0], sizes = [1, 128], strides = [1, 1]} : vector<1x256xf32> to vector<1x128xf32>
    %148 = vector.extract_strided_slice %146 {offsets = [0, 128], sizes = [1, 128], strides = [1, 1]} : vector<1x256xf32> to vector<1x128xf32>
    %149 = vector.extract_strided_slice %136 {offsets = [0, 256], sizes = [1, 128], strides = [1, 1]} : vector<1x384xf32> to vector<1x128xf32>
    %150 = vector.extract_strided_slice %138 {offsets = [0, 256], sizes = [1, 128], strides = [1, 1]} : vector<1x384xf32> to vector<1x128xf32>
    %151 = arith.mulf %147, %150 : vector<1x128xf32>
    %152 = arith.addf %149, %151 : vector<1x128xf32>
    %153 = math.tanh %152 : vector<1x128xf32>
    %cst_35 = arith.constant 1.000000e+00 : f32
    %154 = vector.broadcast %cst_35 : f32 to vector<1x128xf32>
    %155 = arith.subf %154, %148 : vector<1x128xf32>
    %156 = arith.mulf %155, %153 : vector<1x128xf32>
    %157 = arith.mulf %148, %135 : vector<1x128xf32>
    %158 = arith.addf %156, %157 : vector<1x128xf32>
    %c4_36 = arith.constant 4 : index
    %c0_37 = arith.constant 0 : index
    %159 = vector.load %arg6[%c4_36, %c0_37] : memref<8x128xf32, #tpu.memory_space<vmem>>, vector<1x128xf32>
    tpu.vector_store %arg6[%c4_36, %c0_37], %158 {strides = array<i32>} : memref<8x128xf32, #tpu.memory_space<vmem>>, vector<1x128xf32>,
    %c4_i32 = arith.constant 4 : i32
    %160 = arith.addi %7, %c4_i32 : i32
    %161 = arith.cmpi slt, %160, %0 : i32
    %162 = arith.extui %161 : i1 to i32
    %163 = arith.sitofp %162 : i32 to f32
    %164 = arith.subf %158, %135 : vector<1x128xf32>
    %165 = vector.broadcast %163 : f32 to vector<1x128xf32>
    %166 = arith.mulf %165, %164 : vector<1x128xf32>
    %167 = arith.addf %135, %166 : vector<1x128xf32>
    %c5 = arith.constant 5 : index
    %c0_38 = arith.constant 0 : index
    %168 = vector.load %arg2[%c5, %c0_38] : memref<8x384xf32, #tpu.memory_space<vmem>>, vector<1x384xf32>
    %cst_39 = arith.constant dense<0.000000e+00> : vector<1x384xf32>
    %169 = tpu.matmul %167, %4, %cst_39 {dimension_numbers = #tpu.dot_dimension_numbers<[1], [0], [0], [1], [0, 0, 1, 1], [], []>} : vector<1x128xf32>, vector<128x384xf32>, vector<1x384xf32> -> vector<1x384xf32>
    %170 = arith.addf %169, %5 : vector<1x384xf32>
    %171 = vector.extract_strided_slice %168 {offsets = [0, 0], sizes = [1, 256], strides = [1, 1]} : vector<1x384xf32> to vector<1x256xf32>
    %172 = vector.extract_strided_slice %170 {offsets = [0, 0], sizes = [1, 256], strides = [1, 1]} : vector<1x384xf32> to vector<1x256xf32>
    %173 = arith.addf %171, %172 : vector<1x256xf32>
    %174 = arith.negf %173 : vector<1x256xf32>
    %175 = math.exp %174 : vector<1x256xf32>
    %cst_40 = arith.constant 1.000000e+00 : f32
    %176 = vector.broadcast %cst_40 : f32 to vector<1x256xf32>
    %177 = arith.addf %176, %175 : vector<1x256xf32>
    %178 = arith.divf %176, %177 : vector<1x256xf32>
    %179 = vector.extract_strided_slice %178 {offsets = [0, 0], sizes = [1, 128], strides = [1, 1]} : vector<1x256xf32> to vector<1x128xf32>
    %180 = vector.extract_strided_slice %178 {offsets = [0, 128], sizes = [1, 128], strides = [1, 1]} : vector<1x256xf32> to vector<1x128xf32>
    %181 = vector.extract_strided_slice %168 {offsets = [0, 256], sizes = [1, 128], strides = [1, 1]} : vector<1x384xf32> to vector<1x128xf32>
    %182 = vector.extract_strided_slice %170 {offsets = [0, 256], sizes = [1, 128], strides = [1, 1]} : vector<1x384xf32> to vector<1x128xf32>
    %183 = arith.mulf %179, %182 : vector<1x128xf32>
    %184 = arith.addf %181, %183 : vector<1x128xf32>
    %185 = math.tanh %184 : vector<1x128xf32>
    %cst_41 = arith.constant 1.000000e+00 : f32
    %186 = vector.broadcast %cst_41 : f32 to vector<1x128xf32>
    %187 = arith.subf %186, %180 : vector<1x128xf32>
    %188 = arith.mulf %187, %185 : vector<1x128xf32>
    %189 = arith.mulf %180, %167 : vector<1x128xf32>
    %190 = arith.addf %188, %189 : vector<1x128xf32>
    %c5_42 = arith.constant 5 : index
    %c0_43 = arith.constant 0 : index
    %191 = vector.load %arg6[%c5_42, %c0_43] : memref<8x128xf32, #tpu.memory_space<vmem>>, vector<1x128xf32>
    tpu.vector_store %arg6[%c5_42, %c0_43], %190 {strides = array<i32>} : memref<8x128xf32, #tpu.memory_space<vmem>>, vector<1x128xf32>,
    %c5_i32 = arith.constant 5 : i32
    %192 = arith.addi %7, %c5_i32 : i32
    %193 = arith.cmpi slt, %192, %0 : i32
    %194 = arith.extui %193 : i1 to i32
    %195 = arith.sitofp %194 : i32 to f32
    %196 = arith.subf %190, %167 : vector<1x128xf32>
    %197 = vector.broadcast %195 : f32 to vector<1x128xf32>
    %198 = arith.mulf %197, %196 : vector<1x128xf32>
    %199 = arith.addf %167, %198 : vector<1x128xf32>
    %c6 = arith.constant 6 : index
    %c0_44 = arith.constant 0 : index
    %200 = vector.load %arg2[%c6, %c0_44] : memref<8x384xf32, #tpu.memory_space<vmem>>, vector<1x384xf32>
    %cst_45 = arith.constant dense<0.000000e+00> : vector<1x384xf32>
    %201 = tpu.matmul %199, %4, %cst_45 {dimension_numbers = #tpu.dot_dimension_numbers<[1], [0], [0], [1], [0, 0, 1, 1], [], []>} : vector<1x128xf32>, vector<128x384xf32>, vector<1x384xf32> -> vector<1x384xf32>
    %202 = arith.addf %201, %5 : vector<1x384xf32>
    %203 = vector.extract_strided_slice %200 {offsets = [0, 0], sizes = [1, 256], strides = [1, 1]} : vector<1x384xf32> to vector<1x256xf32>
    %204 = vector.extract_strided_slice %202 {offsets = [0, 0], sizes = [1, 256], strides = [1, 1]} : vector<1x384xf32> to vector<1x256xf32>
    %205 = arith.addf %203, %204 : vector<1x256xf32>
    %206 = arith.negf %205 : vector<1x256xf32>
    %207 = math.exp %206 : vector<1x256xf32>
    %cst_46 = arith.constant 1.000000e+00 : f32
    %208 = vector.broadcast %cst_46 : f32 to vector<1x256xf32>
    %209 = arith.addf %208, %207 : vector<1x256xf32>
    %210 = arith.divf %208, %209 : vector<1x256xf32>
    %211 = vector.extract_strided_slice %210 {offsets = [0, 0], sizes = [1, 128], strides = [1, 1]} : vector<1x256xf32> to vector<1x128xf32>
    %212 = vector.extract_strided_slice %210 {offsets = [0, 128], sizes = [1, 128], strides = [1, 1]} : vector<1x256xf32> to vector<1x128xf32>
    %213 = vector.extract_strided_slice %200 {offsets = [0, 256], sizes = [1, 128], strides = [1, 1]} : vector<1x384xf32> to vector<1x128xf32>
    %214 = vector.extract_strided_slice %202 {offsets = [0, 256], sizes = [1, 128], strides = [1, 1]} : vector<1x384xf32> to vector<1x128xf32>
    %215 = arith.mulf %211, %214 : vector<1x128xf32>
    %216 = arith.addf %213, %215 : vector<1x128xf32>
    %217 = math.tanh %216 : vector<1x128xf32>
    %cst_47 = arith.constant 1.000000e+00 : f32
    %218 = vector.broadcast %cst_47 : f32 to vector<1x128xf32>
    %219 = arith.subf %218, %212 : vector<1x128xf32>
    %220 = arith.mulf %219, %217 : vector<1x128xf32>
    %221 = arith.mulf %212, %199 : vector<1x128xf32>
    %222 = arith.addf %220, %221 : vector<1x128xf32>
    %c6_48 = arith.constant 6 : index
    %c0_49 = arith.constant 0 : index
    %223 = vector.load %arg6[%c6_48, %c0_49] : memref<8x128xf32, #tpu.memory_space<vmem>>, vector<1x128xf32>
    tpu.vector_store %arg6[%c6_48, %c0_49], %222 {strides = array<i32>} : memref<8x128xf32, #tpu.memory_space<vmem>>, vector<1x128xf32>,
    %c6_i32 = arith.constant 6 : i32
    %224 = arith.addi %7, %c6_i32 : i32
    %225 = arith.cmpi slt, %224, %0 : i32
    %226 = arith.extui %225 : i1 to i32
    %227 = arith.sitofp %226 : i32 to f32
    %228 = arith.subf %222, %199 : vector<1x128xf32>
    %229 = vector.broadcast %227 : f32 to vector<1x128xf32>
    %230 = arith.mulf %229, %228 : vector<1x128xf32>
    %231 = arith.addf %199, %230 : vector<1x128xf32>
    %c7 = arith.constant 7 : index
    %c0_50 = arith.constant 0 : index
    %232 = vector.load %arg2[%c7, %c0_50] : memref<8x384xf32, #tpu.memory_space<vmem>>, vector<1x384xf32>
    %cst_51 = arith.constant dense<0.000000e+00> : vector<1x384xf32>
    %233 = tpu.matmul %231, %4, %cst_51 {dimension_numbers = #tpu.dot_dimension_numbers<[1], [0], [0], [1], [0, 0, 1, 1], [], []>} : vector<1x128xf32>, vector<128x384xf32>, vector<1x384xf32> -> vector<1x384xf32>
    %234 = arith.addf %233, %5 : vector<1x384xf32>
    %235 = vector.extract_strided_slice %232 {offsets = [0, 0], sizes = [1, 256], strides = [1, 1]} : vector<1x384xf32> to vector<1x256xf32>
    %236 = vector.extract_strided_slice %234 {offsets = [0, 0], sizes = [1, 256], strides = [1, 1]} : vector<1x384xf32> to vector<1x256xf32>
    %237 = arith.addf %235, %236 : vector<1x256xf32>
    %238 = arith.negf %237 : vector<1x256xf32>
    %239 = math.exp %238 : vector<1x256xf32>
    %cst_52 = arith.constant 1.000000e+00 : f32
    %240 = vector.broadcast %cst_52 : f32 to vector<1x256xf32>
    %241 = arith.addf %240, %239 : vector<1x256xf32>
    %242 = arith.divf %240, %241 : vector<1x256xf32>
    %243 = vector.extract_strided_slice %242 {offsets = [0, 0], sizes = [1, 128], strides = [1, 1]} : vector<1x256xf32> to vector<1x128xf32>
    %244 = vector.extract_strided_slice %242 {offsets = [0, 128], sizes = [1, 128], strides = [1, 1]} : vector<1x256xf32> to vector<1x128xf32>
    %245 = vector.extract_strided_slice %232 {offsets = [0, 256], sizes = [1, 128], strides = [1, 1]} : vector<1x384xf32> to vector<1x128xf32>
    %246 = vector.extract_strided_slice %234 {offsets = [0, 256], sizes = [1, 128], strides = [1, 1]} : vector<1x384xf32> to vector<1x128xf32>
    %247 = arith.mulf %243, %246 : vector<1x128xf32>
    %248 = arith.addf %245, %247 : vector<1x128xf32>
    %249 = math.tanh %248 : vector<1x128xf32>
    %cst_53 = arith.constant 1.000000e+00 : f32
    %250 = vector.broadcast %cst_53 : f32 to vector<1x128xf32>
    %251 = arith.subf %250, %244 : vector<1x128xf32>
    %252 = arith.mulf %251, %249 : vector<1x128xf32>
    %253 = arith.mulf %244, %231 : vector<1x128xf32>
    %254 = arith.addf %252, %253 : vector<1x128xf32>
    %c7_54 = arith.constant 7 : index
    %c0_55 = arith.constant 0 : index
    %255 = vector.load %arg6[%c7_54, %c0_55] : memref<8x128xf32, #tpu.memory_space<vmem>>, vector<1x128xf32>
    tpu.vector_store %arg6[%c7_54, %c0_55], %254 {strides = array<i32>} : memref<8x128xf32, #tpu.memory_space<vmem>>, vector<1x128xf32>,
    %c7_i32 = arith.constant 7 : i32
    %256 = arith.addi %7, %c7_i32 : i32
    %257 = arith.cmpi slt, %256, %0 : i32
    %258 = arith.extui %257 : i1 to i32
    %259 = arith.sitofp %258 : i32 to f32
    %260 = arith.subf %254, %231 : vector<1x128xf32>
    %261 = vector.broadcast %259 : f32 to vector<1x128xf32>
    %262 = arith.mulf %261, %260 : vector<1x128xf32>
    %263 = arith.addf %231, %262 : vector<1x128xf32>
    %c0_56 = arith.constant 0 : index
    %c0_57 = arith.constant 0 : index
    %264 = vector.load %arg7[%c0_56, %c0_57] : memref<1x128xf32, #tpu.memory_space<vmem>>, vector<1x128xf32>
    tpu.vector_store %arg7[%c0_56, %c0_57], %263 {strides = array<i32>} : memref<1x128xf32, #tpu.memory_space<vmem>>, vector<1x128xf32>,
    return
  }
  func.func @transform_0(%arg0: i32, %arg1: memref<1xi32, #tpu.memory_space<smem>>) -> (i32, i32) {
    %c0_i32 = arith.constant 0 : i32
    %c0_i32_0 = arith.constant 0 : i32
    return %arg0, %c0_i32 : i32, i32
  }
  func.func @transform_1(%arg0: i32, %arg1: memref<1xi32, #tpu.memory_space<smem>>) -> (i32, i32) {
    %c0_i32 = arith.constant 0 : i32
    %c0_i32_0 = arith.constant 0 : i32
    %c0_i32_1 = arith.constant 0 : i32
    return %c0_i32, %c0_i32_0 : i32, i32
  }
  func.func @transform_2(%arg0: i32, %arg1: memref<1xi32, #tpu.memory_space<smem>>) -> (i32, i32) {
    %c0_i32 = arith.constant 0 : i32
    %c0_i32_0 = arith.constant 0 : i32
    %c0_i32_1 = arith.constant 0 : i32
    return %c0_i32, %c0_i32_0 : i32, i32
  }
  func.func @transform_3(%arg0: i32, %arg1: memref<1xi32, #tpu.memory_space<smem>>) -> (i32, i32) {
    %c0_i32 = arith.constant 0 : i32
    %c0_i32_0 = arith.constant 0 : i32
    %c0_i32_1 = arith.constant 0 : i32
    return %c0_i32, %c0_i32_0 : i32, i32
  }
  func.func @transform_4(%arg0: i32, %arg1: memref<1xi32, #tpu.memory_space<smem>>) -> (i32, i32) {
    %c0_i32 = arith.constant 0 : i32
    %c0_i32_0 = arith.constant 0 : i32
    return %arg0, %c0_i32 : i32, i32
  }
  func.func @transform_5(%arg0: i32, %arg1: memref<1xi32, #tpu.memory_space<smem>>) -> (i32, i32) {
    %c0_i32 = arith.constant 0 : i32
    %c0_i32_0 = arith.constant 0 : i32
    %c0_i32_1 = arith.constant 0 : i32
    return %c0_i32, %c0_i32_0 : i32, i32
  }
}

</mosaic_0001>

<llo_original>
// kernel: _encoder_gru_bucketed.1
$region0: #{_encoder_gru_bucketed.1}
  #allocation0 [shape = 'u32[]', space=smem, size = 0x4, offset = 0x4, fixed_abs, tag = 'smem constant byte address 0x4 - core index']
  #allocation1 [shape = 'u32[72,128]{1,0:T(1,128)}', space=vmem, size = 0x9000, scoped, tag = 'internal scratch']
  #allocation2 [shape = 's32[1]{0}', space=sflag, size = 0x4, scoped, tag = 'scoped memory for _encoder_gru_bucketed.1']
  #allocation3 [shape = 's32[1]{0:T(128)S(6)}', space=smem, size = 0x200, scoped, tag = 'prefetched SMEM operand 0']
  %s0 = inlined_call_operand.<no memory space> [shape: s32[1], index: 0, kind: input, shape index: {}]
  %s1 = inlined_call_operand.vmem [shape: f32[16,384], index: 1, kind: input, shape index: {}]
  %s2 = inlined_call_operand.vmem [shape: f32[1,128], index: 2, kind: input, shape index: {}]
  %s3 = inlined_call_operand.vmem [shape: f32[128,384], index: 3, kind: input, shape index: {}]
  %s4 = inlined_call_operand.vmem [shape: f32[1,384], index: 4, kind: input, shape index: {}]
  %s5 = inlined_call_operand.hbm [shape: f32[16,128], index: 5, kind: output, shape index: {0}]
  %s6 = inlined_call_operand.hbm [shape: f32[1,128], index: 6, kind: output, shape index: {1}]
  %7 = xla_tuple %s5, %s6
  %s8 = sld [smem:[#allocation0]]
  $region61: #{_encoder_gru_bucketed.1} parent=0
    _
  %s10 = ssub.s32 1, %s8
  %s11 = scalar_select 0, %s10, %s8
  %12 = sst [smem:[#allocation3]] %s0
  $region1: #{_encoder_gru_bucketed.1} parent=0
    #allocation4 [shape = 'u8[8192]{0}', space=vmem, size = 0x2000, scoped, tag = 'output window, operand 0']
    #allocation5 [shape = 's32[2]{0}', space=sflag, size = 0x8, scoped, tag = 'scoped memory for _encoder_gru_bucketed.1']
    #allocation6 [shape = 'u8[512]{0}', space=vmem, size = 0x400, scoped, tag = 'output window, operand 1, single buffered']
    #allocation7 [shape = 's32[1]{0}', space=sflag, size = 0x4, scoped, tag = 'scoped memory for _encoder_gru_bucketed.1']
    %13 = vsyncpa [#allocation5], 0
    %s14 = scalar_lea.sflag [#allocation5], 1
    %15 = vsyncpa %s14, 0
    %16 = vsyncpa [#allocation7], 0
    loop: start=0, step=1, limit=4
    $region2: #{_encoder_gru_bucketed.1} parent=1 // loop_pre_header
      _
    $region3: #{_encoder_gru_bucketed.1} parent=1 // loop_header
      %s18 = sphi 0, %s22
      %p19 = scmp.ge.s32.totalorder %s18, 4
      %s28 = sphi 0, %s30
      %s31 = sphi 0, %s28
      %s32 = sphi 0, %s31
      %s48 = sphi 0, %s32
      %s52 = sphi 0, %s52
      %s54 = sphi 0, %s52
      %s55 = sphi 0, %s54
      %s69 = sphi 0, %s55
      %s73 = sphi 0, %s73
      %s75 = sphi 0, %s73
      %s76 = sphi 0, %s75
      %s90 = sphi 0, %s76
      %s94 = sphi 0, %s94
      %s96 = sphi 0, %s94
      %s97 = sphi 0, %s96
      %s111 = sphi 0, %s97
      %s117 = sphi 0, %s119
      %s120 = sphi 0, %s117
      %s121 = sphi 0, %s120
      %s137 = sphi 0, %s121
      %s141 = sphi 0, %s141
      %s143 = sphi 0, %s141
      %s144 = sphi 0, %s143
      %s158 = sphi 0, %s144
    $region4: #{_encoder_gru_bucketed.1} parent=1 // loop_header_branch
      %21 = sbr.rel (%p19) target = $region8
    $region5: #{_encoder_gru_bucketed.1} parent=1 // loop_body
      %s23 = ssub.s32 %s18, 1
      %s24 = ssub.s32 %s18, 2
      %s25 = sadd.s32 %s18, 1
      %s26 = ssub.s32 %s18, %s25
      %p27 = scmp.eq.s32.totalorder %s26, 0
      %s29 = sadd.s32 %s28, 1
      %s30 = scalar_select %p27, %s28, %s29
      %p33 = pneg %p27
      %p34 = scmp.eq.s32.totalorder %s18, 1
      %p35 = por %p33, %p34
      %p36 = scmp.ne.s32.totalorder %s28, %s31
      %p37 = scmp.eq.s32.totalorder %s18, 0
      %p38 = por %p36, %p37
      %p39 = scmp.ne.s32.totalorder %s28, %s31
      %p40 = scmp.eq.s32.totalorder %s23, 1
      %p41 = por %p39, %p40
      %p42 = scmp.ne.s32.totalorder %s31, %s32
      %p43 = scmp.eq.s32.totalorder %s23, 0
      %p44 = por %p42, %p43
      %p45 = scmp.ne.s32.totalorder %s31, %s32
      %p46 = scmp.eq.s32.totalorder %s24, 1
      %p47 = por %p45, %p46
      %p49 = scmp.ne.s32.totalorder %s32, %s48
      %p50 = scmp.eq.s32.totalorder %s24, 0
      %p51 = por %p49, %p50
      %s53 = sadd.s32 %s52, 1
      %p56 = scmp.eq.s32.totalorder %s18, 1
      %p57 = scmp.ne.s32.totalorder %s52, %s54
      %p58 = scmp.eq.s32.totalorder %s18, 0
      %p59 = por %p57, %p58
      %p60 = scmp.ne.s32.totalorder %s52, %s54
      %p61 = scmp.eq.s32.totalorder %s23, 1
      %p62 = por %p60, %p61
      %p63 = scmp.ne.s32.totalorder %s54, %s55
      %p64 = scmp.eq.s32.totalorder %s23, 0
      %p65 = por %p63, %p64
      %p66 = scmp.ne.s32.totalorder %s54, %s55
      %p67 = scmp.eq.s32.totalorder %s24, 1
      %p68 = por %p66, %p67
      %p70 = scmp.ne.s32.totalorder %s55, %s69
      %p71 = scmp.eq.s32.totalorder %s24, 0
      %p72 = por %p70, %p71
      %s74 = sadd.s32 %s73, 1
      %p77 = scmp.eq.s32.totalorder %s18, 1
      %p78 = scmp.ne.s32.totalorder %s73, %s75
      %p79 = scmp.eq.s32.totalorder %s18, 0
      %p80 = por %p78, %p79
      %p81 = scmp.ne.s32.totalorder %s73, %s75
      %p82 = scmp.eq.s32.totalorder %s23, 1
      %p83 = por %p81, %p82
      %p84 = scmp.ne.s32.totalorder %s75, %s76
      %p85 = scmp.eq.s32.totalorder %s23, 0
      %p86 = por %p84, %p85
      %p87 = scmp.ne.s32.totalorder %s75, %s76
      %p88 = scmp.eq.s32.totalorder %s24, 1
      %p89 = por %p87, %p88
      %p91 = scmp.ne.s32.totalorder %s76, %s90
      %p92 = scmp.eq.s32.totalorder %s24, 0
      %p93 = por %p91, %p92
      %s95 = sadd.s32 %s94, 1
      %p98 = scmp.eq.s32.totalorder %s18, 1
      %p99 = scmp.ne.s32.totalorder %s94, %s96
      %p100 = scmp.eq.s32.totalorder %s18, 0
      %p101 = por %p99, %p100
      %p102 = scmp.ne.s32.totalorder %s94, %s96
      %p103 = scmp.eq.s32.totalorder %s23, 1
      %p104 = por %p102, %p103
      %p105 = scmp.ne.s32.totalorder %s96, %s97
      %p106 = scmp.eq.s32.totalorder %s23, 0
      %p107 = por %p105, %p106
      %p108 = scmp.ne.s32.totalorder %s96, %s97
      %p109 = scmp.eq.s32.totalorder %s24, 1
      %p110 = por %p108, %p109
      %p112 = scmp.ne.s32.totalorder %s97, %s111
      %p113 = scmp.eq.s32.totalorder %s24, 0
      %p114 = por %p112, %p113
      %s115 = ssub.s32 %s18, %s25
      %p116 = scmp.eq.s32.totalorder %s115, 0
      %s118 = sadd.s32 %s117, 1
      %s119 = scalar_select %p116, %s117, %s118
      %p122 = pneg %p116
      %p123 = scmp.eq.s32.totalorder %s18, 1
      %p124 = por %p122, %p123
      %p125 = scmp.ne.s32.totalorder %s117, %s120
      %p126 = scmp.eq.s32.totalorder %s18, 0
      %p127 = por %p125, %p126
      %p128 = scmp.ne.s32.totalorder %s117, %s120
      %p129 = scmp.eq.s32.totalorder %s23, 1
      %p130 = por %p128, %p129
      %p131 = scmp.ne.s32.totalorder %s120, %s121
      %p132 = scmp.eq.s32.totalorder %s23, 0
      %p133 = por %p131, %p132
      %p134 = scmp.ne.s32.totalorder %s120, %s121
      %p135 = scmp.eq.s32.totalorder %s24, 1
      %p136 = por %p134, %p135
      %p138 = scmp.ne.s32.totalorder %s121, %s137
      %p139 = scmp.eq.s32.totalorder %s24, 0
      %p140 = por %p138, %p139
      %s142 = sadd.s32 %s141, 1
      %p145 = scmp.eq.s32.totalorder %s18, 1
      %p146 = scmp.ne.s32.totalorder %s141, %s143
      %p147 = scmp.eq.s32.totalorder %s18, 0
      %p148 = por %p146, %p147
      %p149 = scmp.ne.s32.totalorder %s141, %s143
      %p150 = scmp.eq.s32.totalorder %s23, 1
      %p151 = por %p149, %p150
      %p152 = scmp.ne.s32.totalorder %s143, %s144
      %p153 = scmp.eq.s32.totalorder %s23, 0
      %p154 = por %p152, %p153
      %p155 = scmp.ne.s32.totalorder %s143, %s144
      %p156 = scmp.eq.s32.totalorder %s24, 1
      %p157 = por %p155, %p156
      %p159 = scmp.ne.s32.totalorder %s144, %s158
      %p160 = scmp.eq.s32.totalorder %s24, 0
      %p161 = por %p159, %p160
      %p162 = scmp.le.s32.totalorder 1, %s18
      %p163 = scmp.lt.s32.totalorder %s18, 3
      %p164 = pnand %p162, %p163
      %p165 = pneg %p164
      // Predicated region
      $region9: #{_encoder_gru_bucketed.1} parent=5 // pred_check
        _
      $region10: #{_encoder_gru_bucketed.1} parent=5 // pred_check_branch
        %167 = sbr.rel (%p164) target = $region12
      $region11: #{_encoder_gru_bucketed.1} parent=5 // pred_region
        %s168 = ssub.s32 %s18, 1
        // Predicated region
        $region13: #{_encoder_gru_bucketed.1} parent=11 // pred_check
          %p169 = pneg %p65
        $region14: #{_encoder_gru_bucketed.1} parent=11 // pred_check_branch
          %171 = sbr.rel (%p169) target = $region16
        $region15: #{_encoder_gru_bucketed.1} parent=11 // pred_region
          _
        $region16: #{_encoder_gru_bucketed.1} parent=11 // pred_fallthru
          _
        // Predicated region
        $region17: #{_encoder_gru_bucketed.1} parent=11 // pred_check
          %p172 = pneg %p86
        $region18: #{_encoder_gru_bucketed.1} parent=11 // pred_check_branch
          %174 = sbr.rel (%p172) target = $region20
        $region19: #{_encoder_gru_bucketed.1} parent=11 // pred_region
          _
        $region20: #{_encoder_gru_bucketed.1} parent=11 // pred_fallthru
          _
        // Predicated region
        $region21: #{_encoder_gru_bucketed.1} parent=11 // pred_check
          %p175 = pneg %p107
        $region22: #{_encoder_gru_bucketed.1} parent=11 // pred_check_branch
          %177 = sbr.rel (%p175) target = $region24
        $region23: #{_encoder_gru_bucketed.1} parent=11 // pred_region
          _
        $region24: #{_encoder_gru_bucketed.1} parent=11 // pred_fallthru
          _
      $region12: #{_encoder_gru_bucketed.1} parent=5 // pred_fallthru
        _
      %p178 = scmp.lt.s32.totalorder %s18, 2
      // Predicated region
      $region25: #{_encoder_gru_bucketed.1} parent=5 // pred_check
        %p179 = pneg %p178
      $region26: #{_encoder_gru_bucketed.1} parent=5 // pred_check_branch
        %181 = sbr.rel (%p179) target = $region28
      $region27: #{_encoder_gru_bucketed.1} parent=5 // pred_region
        // Predicated region
        $region29: #{_encoder_gru_bucketed.1} parent=27 // pred_check
          %p182 = pneg %p38
        $region30: #{_encoder_gru_bucketed.1} parent=27 // pred_check_branch
          %184 = sbr.rel (%p182) target = $region32
        $region31: #{_encoder_gru_bucketed.1} parent=27 // pred_region
          %p185 = scmp.lt.s32.totalorder %s18, 1
          %s186 = scalar_select %p185, %s18, 1
          %s187 = smul.addr %s186, 3
          %s188 = smul.addr %s187, 8
          %s189 = scalar_lea.vmem %s1, %s188
        $region32: #{_encoder_gru_bucketed.1} parent=27 // pred_fallthru
          _
      $region28: #{_encoder_gru_bucketed.1} parent=5 // pred_fallthru
        _
      %p190 = scmp.le.s32.totalorder 1, %s18
      %p191 = scmp.lt.s32.totalorder %s18, 3
      %p192 = pnand %p190, %p191
      %p193 = pneg %p192
      // Predicated region
      $region33: #{_encoder_gru_bucketed.1} parent=5 // pred_check
        _
      $region34: #{_encoder_gru_bucketed.1} parent=5 // pred_check_branch
        %195 = sbr.rel (%p192) target = $region36
      $region35: #{_encoder_gru_bucketed.1} parent=5 // pred_region
        %s196 = ssub.s32 %s18, 1
        %p197 = scmp.lt.s32.totalorder %s23, 1
        %s198 = scalar_select %p197, %s23, 1
        %s199 = smul.addr %s198, 3
        %s200 = smul.addr %s199, 8
        %s201 = scalar_lea.vmem %s1, %s200
        %p202 = pneg %p44
        %p203 = pneg %p41
        %p204 = pneg %p65
        %p205 = pneg %p62
        %p206 = pneg %p86
        %p207 = pneg %p83
        %p208 = pneg %p107
        %p209 = pneg %p104
        %p210 = pneg %p133
        %p211 = pneg %p130
        %s212 = sand.u32 %s120, 1
        %s213 = scalar_lea.sflag [#allocation5], %s212
        %s214 = sand.u32 %s120, 1
        %s215 = smul.addr %s214, 8
        %s216 = scalar_lea.vmem [#allocation4], %s215
        %p217 = pneg %p154
        %p218 = pneg %p151
        %p219 = scmp.lt.s32.totalorder %s23, 1
        %s220 = scalar_select %p219, %s23, 1
        %s221 = smul.addr %s220, 3
        %s222 = smul.addr %s221, 8
        %s223 = scalar_lea.vmem %s1, %s222
        %s224 = sld [smem:[#allocation3]]
        %p225 = scmp.eq.s32.totalorder %s23, 0
        // Predicated region
        $region37: #{_encoder_gru_bucketed.1} parent=35 // pred_check
          %p226 = pneg %p225
        $region38: #{_encoder_gru_bucketed.1} parent=35 // pred_check_branch
          %228 = sbr.rel (%p226) target = $region40
        $region39: #{_encoder_gru_bucketed.1} parent=35 // pred_region
          %v229 = vld [vmem:[%s2] sm:$0x1]
          %230 = vst [vmem:[#allocation6] sm:$0x1] %v229
        $region40: #{_encoder_gru_bucketed.1} parent=35 // pred_fallthru
          _
        %v231 = vld [vmem:[%s3] sm:$0xff]
        %v232 = vld [vmem:[%s3 + $0x8] sm:$0xff]
        %v233 = vld [vmem:[%s3 + $0x10] sm:$0xff]
        %v234 = vld [vmem:[%s3 + $0x18] sm:$0xff]
        %v235 = vld [vmem:[%s3 + $0x20] sm:$0xff]
        %v236 = vld [vmem:[%s3 + $0x28] sm:$0xff]
        %v237 = vld [vmem:[%s3 + $0x30] sm:$0xff]
        %v238 = vld [vmem:[%s3 + $0x38] sm:$0xff]
        %v239 = vld [vmem:[%s3 + $0x40] sm:$0xff]
        %v240 = vld [vmem:[%s3 + $0x48] sm:$0xff]
        %v241 = vld [vmem:[%s3 + $0x50] sm:$0xff]
        %v242 = vld [vmem:[%s3 + $0x58] sm:$0xff]
        %v243 = vld [vmem:[%s3 + $0x60] sm:$0xff]
        %v244 = vld [vmem:[%s3 + $0x68] sm:$0xff]
        %v245 = vld [vmem:[%s3 + $0x70] sm:$0xff]
        %v246 = vld [vmem:[%s3 + $0x78] sm:$0xff]
        %v247 = vld [vmem:[%s3 + $0x80] sm:$0xff]
        %v248 = vld [vmem:[%s3 + $0x88] sm:$0xff]
        %v249 = vld [vmem:[%s3 + $0x90] sm:$0xff]
        %v250 = vld [vmem:[%s3 + $0x98] sm:$0xff]
        %v251 = vld [vmem:[%s3 + $0xa0] sm:$0xff]
        %v252 = vld [vmem:[%s3 + $0xa8] sm:$0xff]
        %v253 = vld [vmem:[%s3 + $0xb0] sm:$0xff]
        %v254 = vld [vmem:[%s3 + $0xb8] sm:$0xff]
        %v255 = vld [vmem:[%s3 + $0xc0] sm:$0xff]
        %v256 = vld [vmem:[%s3 + $0xc8] sm:$0xff]
        %v257 = vld [vmem:[%s3 + $0xd0] sm:$0xff]
        %v258 = vld [vmem:[%s3 + $0xd8] sm:$0xff]
        %v259 = vld [vmem:[%s3 + $0xe0] sm:$0xff]
        %v260 = vld [vmem:[%s3 + $0xe8] sm:$0xff]
        %v261 = vld [vmem:[%s3 + $0xf0] sm:$0xff]
        %v262 = vld [vmem:[%s3 + $0xf8] sm:$0xff]
        %v263 = vld [vmem:[%s3 + $0x100] sm:$0xff]
        %v264 = vld [vmem:[%s3 + $0x108] sm:$0xff]
        %v265 = vld [vmem:[%s3 + $0x110] sm:$0xff]
        %v266 = vld [vmem:[%s3 + $0x118] sm:$0xff]
        %v267 = vld [vmem:[%s3 + $0x120] sm:$0xff]
        %v268 = vld [vmem:[%s3 + $0x128] sm:$0xff]
        %v269 = vld [vmem:[%s3 + $0x130] sm:$0xff]
        %v270 = vld [vmem:[%s3 + $0x138] sm:$0xff]
        %v271 = vld [vmem:[%s3 + $0x140] sm:$0xff]
        %v272 = vld [vmem:[%s3 + $0x148] sm:$0xff]
        %v273 = vld [vmem:[%s3 + $0x150] sm:$0xff]
        %v274 = vld [vmem:[%s3 + $0x158] sm:$0xff]
        %v275 = vld [vmem:[%s3 + $0x160] sm:$0xff]
        %v276 = vld [vmem:[%s3 + $0x168] sm:$0xff]
        %v277 = vld [vmem:[%s3 + $0x170] sm:$0xff]
        %v278 = vld [vmem:[%s3 + $0x178] sm:$0xff]
        %v279 = vld [vmem:[%s4] sm:$0x7]
        %v280 = vld [vmem:[#allocation6] sm:$0x1]
        %s281 = smul.u32 %s23, 8
        %v282 = vld [vmem:[%s223] ss:$8 sm:$0x7]
        %v284 = vperm.slane %v279, 0
        %v285 = vperm.slane %v279, 1
        %v286 = vperm.slane %v279, 2
        %290 = vmatpush.msra.mxu0 %v276
        %291 = vmatpush.msra.mxu0 %v273
        %292 = vmatpush.msra.mxu0 %v270
        %293 = vmatpush.msra.mxu0 %v267
        %294 = vmatpush.msra.mxu0 %v264
        %295 = vmatpush.msra.mxu0 %v261
        %296 = vmatpush.msra.mxu0 %v258
        %297 = vmatpush.msra.mxu0 %v255
        %298 = vmatpush.msra.mxu0 %v252
        %299 = vmatpush.msra.mxu0 %v249
        %300 = vmatpush.msra.mxu0 %v246
        %301 = vmatpush.msra.mxu0 %v243
        %302 = vmatpush.msra.mxu0 %v240
        %303 = vmatpush.msra.mxu0 %v237
        %304 = vmatpush.msra.mxu0 %v234
        %305 = vmatpush.msra.mxu0 %v231
        %306 = vmatmul.f32.gmra.mxu0 %v280
        %v307 = vpop.f32.mrf.mxu0
        %v308 = vadd.f32 %v284, %v307
        %309 = vdwg.mxu0
        %310 = vmatpush.msra.mxu0 %v277
        %311 = vmatpush.msra.mxu0 %v274
        %312 = vmatpush.msra.mxu0 %v271
        %313 = vmatpush.msra.mxu0 %v268
        %314 = vmatpush.msra.mxu0 %v265
        %315 = vmatpush.msra.mxu0 %v262
        %316 = vmatpush.msra.mxu0 %v259
        %317 = vmatpush.msra.mxu0 %v256
        %318 = vmatpush.msra.mxu0 %v253
        %319 = vmatpush.msra.mxu0 %v250
        %320 = vmatpush.msra.mxu0 %v247
        %321 = vmatpush.msra.mxu0 %v244
        %322 = vmatpush.msra.mxu0 %v241
        %323 = vmatpush.msra.mxu0 %v238
        %324 = vmatpush.msra.mxu0 %v235
        %325 = vmatpush.msra.mxu0 %v232
        %326 = vmatmul.f32.gmra.mxu0 %v280
        %v327 = vpop.f32.mrf.mxu0
        %v328 = vadd.f32 %v285, %v327
        %329 = vdwg.mxu0
        %330 = vmatpush.msra.mxu0 %v278
        %331 = vmatpush.msra.mxu0 %v275
        %332 = vmatpush.msra.mxu0 %v272
        %333 = vmatpush.msra.mxu0 %v269
        %334 = vmatpush.msra.mxu0 %v266
        %335 = vmatpush.msra.mxu0 %v263
        %336 = vmatpush.msra.mxu0 %v260
        %337 = vmatpush.msra.mxu0 %v257
        %338 = vmatpush.msra.mxu0 %v254
        %339 = vmatpush.msra.mxu0 %v251
        %340 = vmatpush.msra.mxu0 %v248
        %341 = vmatpush.msra.mxu0 %v245
        %342 = vmatpush.msra.mxu0 %v242
        %343 = vmatpush.msra.mxu0 %v239
        %344 = vmatpush.msra.mxu0 %v236
        %345 = vmatpush.msra.mxu0 %v233
        %346 = vmatmul.f32.gmra.mxu0 %v280
        %v347 = vpop.f32.mrf.mxu0
        %v348 = vadd.f32 %v286, %v347
        %349 = vdwg.mxu0
        %v352 = vrot.slane %v328, 7
        %vm353 = vcmask 1040384
        %v354 = vsel %vm353, %v308, %v352
        %v356 = vadd.f32 %v282, %v354
        %v357 = vxor.u32 %v356, 2147483648
        %v358 = vmul.f32 %v357, 1.442695
        %v359 = vpow.pop %v358
        %v360 = vadd.f32 %v359, 1.0
        %v361 = vrcp.pop %v360
        %v362 = vmul.f32 %v360, %v361
        %v363 = vsub.f32 1.0, %v362
        %v364 = vmul.f32 %v361, %v363
        %v365 = vadd.f32 %v361, %v364
        %vm366 = vweird.f32 %v360
        %vm367 = vweird.f32 %v361
        %vm368 = vmor %vm366, %vm367
        %v369 = vsel %vm368, %v361, %v365
        %v370 = vand.u32 2147483647, %v360
        %vm371 = vcmp.eq.f32.partialorder %v370, 8.507059e+37
        %v372 = vand.u32 %v360, 2147483648
        %v373 = vor.u32 1.1754944e-38, %v372
        %v374 = vsel %vm371, %v373, %v369
        %v375 = vmul.f32 1.0, %v374
        %v376 = vmul.f32 %v375, %v348
        %v378 = vrot.slane %v282, 2
        %v380 = vadd.f32 %v378, %v376
        %v381 = vtanh.pop %v380
        %v383 = vrot.slane %v375, 1
        %v385 = vsub.f32 1.0, %v383
        %v386 = vmul.f32 %v385, %v381
        %v387 = vmul.f32 %v383, %v280
        %v388 = vadd.f32 %v386, %v387
        %389 = vst [vmem:[%s216] sm:$0x1] %v388
        %p390 = scmp.lt.s32.totalorder %s281, %s224
        %s391 = scalar_select %p390, 1, 0
        %s392 = scvt.s32.f32 %s391
        %v393 = vsub.f32 %v388, %v280
        %v394 = vstv %s392
        %v395 = vmul.f32 %v394, %v393
        %v396 = vadd.f32 %v280, %v395
        %s397 = scalar_lea.vmem %s223, 1
        %v398 = vld [vmem:[%s397] ss:$8 sm:$0x7]
        %399 = vmatpush.msra.mxu0 %v276
        %400 = vmatpush.msra.mxu0 %v273
        %401 = vmatpush.msra.mxu0 %v270
        %402 = vmatpush.msra.mxu0 %v267
        %403 = vmatpush.msra.mxu0 %v264
        %404 = vmatpush.msra.mxu0 %v261
        %405 = vmatpush.msra.mxu0 %v258
        %406 = vmatpush.msra.mxu0 %v255
        %407 = vmatpush.msra.mxu0 %v252
        %408 = vmatpush.msra.mxu0 %v249
        %409 = vmatpush.msra.mxu0 %v246
        %410 = vmatpush.msra.mxu0 %v243
        %411 = vmatpush.msra.mxu0 %v240
        %412 = vmatpush.msra.mxu0 %v237
        %413 = vmatpush.msra.mxu0 %v234
        %414 = vmatpush.msra.mxu0 %v231
        %415 = vmatmul.f32.gmra.mxu0 %v396
        %v416 = vpop.f32.mrf.mxu0
        %v417 = vadd.f32 %v284, %v416
        %418 = vdwg.mxu0
        %419 = vmatpush.msra.mxu0 %v277
        %420 = vmatpush.msra.mxu0 %v274
        %421 = vmatpush.msra.mxu0 %v271
        %422 = vmatpush.msra.mxu0 %v268
        %423 = vmatpush.msra.mxu0 %v265
        %424 = vmatpush.msra.mxu0 %v262
        %425 = vmatpush.msra.mxu0 %v259
        %426 = vmatpush.msra.mxu0 %v256
        %427 = vmatpush.msra.mxu0 %v253
        %428 = vmatpush.msra.mxu0 %v250
        %429 = vmatpush.msra.mxu0 %v247
        %430 = vmatpush.msra.mxu0 %v244
        %431 = vmatpush.msra.mxu0 %v241
        %432 = vmatpush.msra.mxu0 %v238
        %433 = vmatpush.msra.mxu0 %v235
        %434 = vmatpush.msra.mxu0 %v232
        %435 = vmatmul.f32.gmra.mxu0 %v396
        %v436 = vpop.f32.mrf.mxu0
        %v437 = vadd.f32 %v285, %v436
        %438 = vdwg.mxu0
        %439 = vmatpush.msra.mxu0 %v278
        %440 = vmatpush.msra.mxu0 %v275
        %441 = vmatpush.msra.mxu0 %v272
        %442 = vmatpush.msra.mxu0 %v269
        %443 = vmatpush.msra.mxu0 %v266
        %444 = vmatpush.msra.mxu0 %v263
        %445 = vmatpush.msra.mxu0 %v260
        %446 = vmatpush.msra.mxu0 %v257
        %447 = vmatpush.msra.mxu0 %v254
        %448 = vmatpush.msra.mxu0 %v251
        %449 = vmatpush.msra.mxu0 %v248
        %450 = vmatpush.msra.mxu0 %v245
        %451 = vmatpush.msra.mxu0 %v242
        %452 = vmatpush.msra.mxu0 %v239
        %453 = vmatpush.msra.mxu0 %v236
        %454 = vmatpush.msra.mxu0 %v233
        %455 = vmatmul.f32.gmra.mxu0 %v396
        %v456 = vpop.f32.mrf.mxu0
        %v457 = vadd.f32 %v286, %v456
        %458 = vdwg.mxu0
        %v461 = vrot.slane %v437, 7
        %v462 = vsel %vm353, %v417, %v461
        %v464 = vadd.f32 %v398, %v462
        %v465 = vxor.u32 %v464, 2147483648
        %v466 = vmul.f32 %v465, 1.442695
        %v467 = vpow.pop %v466
        %v468 = vadd.f32 %v467, 1.0
        %v469 = vrcp.pop %v468
        %v470 = vmul.f32 %v468, %v469
        %v471 = vsub.f32 1.0, %v470
        %v472 = vmul.f32 %v469, %v471
        %v473 = vadd.f32 %v469, %v472
        %vm474 = vweird.f32 %v468
        %vm475 = vweird.f32 %v469
        %vm476 = vmor %vm474, %vm475
        %v477 = vsel %vm476, %v469, %v473
        %v478 = vand.u32 2147483647, %v468
        %vm479 = vcmp.eq.f32.partialorder %v478, 8.507059e+37
        %v480 = vand.u32 %v468, 2147483648
        %v481 = vor.u32 1.1754944e-38, %v480
        %v482 = vsel %vm479, %v481, %v477
        %v483 = vmul.f32 1.0, %v482
        %v484 = vmul.f32 %v483, %v457
        %v486 = vrot.slane %v398, 2
        %v488 = vadd.f32 %v486, %v484
        %v489 = vtanh.pop %v488
        %v491 = vrot.slane %v483, 1
        %v493 = vsub.f32 1.0, %v491
        %v494 = vmul.f32 %v493, %v489
        %v495 = vmul.f32 %v491, %v396
        %v496 = vadd.f32 %v494, %v495
        %497 = vst [vmem:[%s216 + $0x1] sm:$0x1] %v496
        %s498 = sadd.s32 %s281, 1
        %p499 = scmp.lt.s32.totalorder %s498, %s224
        %s500 = scalar_select %p499, 1, 0
        %s501 = scvt.s32.f32 %s500
        %v502 = vsub.f32 %v496, %v396
        %v503 = vstv %s501
        %v504 = vmul.f32 %v503, %v502
        %v505 = vadd.f32 %v396, %v504
        %s506 = scalar_lea.vmem %s223, 2
        %v507 = vld [vmem:[%s506] ss:$8 sm:$0x7]
        %508 = vmatpush.msra.mxu0 %v276
        %509 = vmatpush.msra.mxu0 %v273
        %510 = vmatpush.msra.mxu0 %v270
        %511 = vmatpush.msra.mxu0 %v267
        %512 = vmatpush.msra.mxu0 %v264
        %513 = vmatpush.msra.mxu0 %v261
        %514 = vmatpush.msra.mxu0 %v258
        %515 = vmatpush.msra.mxu0 %v255
        %516 = vmatpush.msra.mxu0 %v252
        %517 = vmatpush.msra.mxu0 %v249
        %518 = vmatpush.msra.mxu0 %v246
        %519 = vmatpush.msra.mxu0 %v243
        %520 = vmatpush.msra.mxu0 %v240
        %521 = vmatpush.msra.mxu0 %v237
        %522 = vmatpush.msra.mxu0 %v234
        %523 = vmatpush.msra.mxu0 %v231
        %524 = vmatmul.f32.gmra.mxu0 %v505
        %v525 = vpop.f32.mrf.mxu0
        %v526 = vadd.f32 %v284, %v525
        %527 = vdwg.mxu0
        %528 = vmatpush.msra.mxu0 %v277
        %529 = vmatpush.msra.mxu0 %v274
        %530 = vmatpush.msra.mxu0 %v271
        %531 = vmatpush.msra.mxu0 %v268
        %532 = vmatpush.msra.mxu0 %v265
        %533 = vmatpush.msra.mxu0 %v262
        %534 = vmatpush.msra.mxu0 %v259
        %535 = vmatpush.msra.mxu0 %v256
        %536 = vmatpush.msra.mxu0 %v253
        %537 = vmatpush.msra.mxu0 %v250
        %538 = vmatpush.msra.mxu0 %v247
        %539 = vmatpush.msra.mxu0 %v244
        %540 = vmatpush.msra.mxu0 %v241
        %541 = vmatpush.msra.mxu0 %v238
        %542 = vmatpush.msra.mxu0 %v235
        %543 = vmatpush.msra.mxu0 %v232
        %544 = vmatmul.f32.gmra.mxu0 %v505
        %v545 = vpop.f32.mrf.mxu0
        %v546 = vadd.f32 %v285, %v545
        %547 = vdwg.mxu0
        %548 = vmatpush.msra.mxu0 %v278
        %549 = vmatpush.msra.mxu0 %v275
        %550 = vmatpush.msra.mxu0 %v272
        %551 = vmatpush.msra.mxu0 %v269
        %552 = vmatpush.msra.mxu0 %v266
        %553 = vmatpush.msra.mxu0 %v263
        %554 = vmatpush.msra.mxu0 %v260
        %555 = vmatpush.msra.mxu0 %v257
        %556 = vmatpush.msra.mxu0 %v254
        %557 = vmatpush.msra.mxu0 %v251
        %558 = vmatpush.msra.mxu0 %v248
        %559 = vmatpush.msra.mxu0 %v245
        %560 = vmatpush.msra.mxu0 %v242
        %561 = vmatpush.msra.mxu0 %v239
        %562 = vmatpush.msra.mxu0 %v236
        %563 = vmatpush.msra.mxu0 %v233
        %564 = vmatmul.f32.gmra.mxu0 %v505
        %v565 = vpop.f32.mrf.mxu0
        %v566 = vadd.f32 %v286, %v565
        %567 = vdwg.mxu0
        %v570 = vrot.slane %v546, 7
        %v571 = vsel %vm353, %v526, %v570
        %v573 = vadd.f32 %v507, %v571
        %v574 = vxor.u32 %v573, 2147483648
        %v575 = vmul.f32 %v574, 1.442695
        %v576 = vpow.pop %v575
        %v577 = vadd.f32 %v576, 1.0
        %v578 = vrcp.pop %v577
        %v579 = vmul.f32 %v577, %v578
        %v580 = vsub.f32 1.0, %v579
        %v581 = vmul.f32 %v578, %v580
        %v582 = vadd.f32 %v578, %v581
        %vm583 = vweird.f32 %v577
        %vm584 = vweird.f32 %v578
        %vm585 = vmor %vm583, %vm584
        %v586 = vsel %vm585, %v578, %v582
        %v587 = vand.u32 2147483647, %v577
        %vm588 = vcmp.eq.f32.partialorder %v587, 8.507059e+37
        %v589 = vand.u32 %v577, 2147483648
        %v590 = vor.u32 1.1754944e-38, %v589
        %v591 = vsel %vm588, %v590, %v586
        %v592 = vmul.f32 1.0, %v591
        %v593 = vmul.f32 %v592, %v566
        %v595 = vrot.slane %v507, 2
        %v597 = vadd.f32 %v595, %v593
        %v598 = vtanh.pop %v597
        %v600 = vrot.slane %v592, 1
        %v602 = vsub.f32 1.0, %v600
        %v603 = vmul.f32 %v602, %v598
        %v604 = vmul.f32 %v600, %v505
        %v605 = vadd.f32 %v603, %v604
        %606 = vst [vmem:[%s216 + $0x2] sm:$0x1] %v605
        %s607 = sadd.s32 %s281, 2
        %p608 = scmp.lt.s32.totalorder %s607, %s224
        %s609 = scalar_select %p608, 1, 0
        %s610 = scvt.s32.f32 %s609
        %v611 = vsub.f32 %v605, %v505
        %v612 = vstv %s610
        %v613 = vmul.f32 %v612, %v611
        %v614 = vadd.f32 %v505, %v613
        %s615 = scalar_lea.vmem %s223, 3
        %v616 = vld [vmem:[%s615] ss:$8 sm:$0x7]
        %617 = vmatpush.msra.mxu0 %v276
        %618 = vmatpush.msra.mxu0 %v273
        %619 = vmatpush.msra.mxu0 %v270
        %620 = vmatpush.msra.mxu0 %v267
        %621 = vmatpush.msra.mxu0 %v264
        %622 = vmatpush.msra.mxu0 %v261
        %623 = vmatpush.msra.mxu0 %v258
        %624 = vmatpush.msra.mxu0 %v255
        %625 = vmatpush.msra.mxu0 %v252
        %626 = vmatpush.msra.mxu0 %v249
        %627 = vmatpush.msra.mxu0 %v246
        %628 = vmatpush.msra.mxu0 %v243
        %629 = vmatpush.msra.mxu0 %v240
        %630 = vmatpush.msra.mxu0 %v237
        %631 = vmatpush.msra.mxu0 %v234
        %632 = vmatpush.msra.mxu0 %v231
        %633 = vmatmul.f32.gmra.mxu0 %v614
        %v634 = vpop.f32.mrf.mxu0
        %v635 = vadd.f32 %v284, %v634
        %636 = vdwg.mxu0
        %637 = vmatpush.msra.mxu0 %v277
        %638 = vmatpush.msra.mxu0 %v274
        %639 = vmatpush.msra.mxu0 %v271
        %640 = vmatpush.msra.mxu0 %v268
        %641 = vmatpush.msra.mxu0 %v265
        %642 = vmatpush.msra.mxu0 %v262
        %643 = vmatpush.msra.mxu0 %v259
        %644 = vmatpush.msra.mxu0 %v256
        %645 = vmatpush.msra.mxu0 %v253
        %646 = vmatpush.msra.mxu0 %v250
        %647 = vmatpush.msra.mxu0 %v247
        %648 = vmatpush.msra.mxu0 %v244
        %649 = vmatpush.msra.mxu0 %v241
        %650 = vmatpush.msra.mxu0 %v238
        %651 = vmatpush.msra.mxu0 %v235
        %652 = vmatpush.msra.mxu0 %v232
        %653 = vmatmul.f32.gmra.mxu0 %v614
        %v654 = vpop.f32.mrf.mxu0
        %v655 = vadd.f32 %v285, %v654
        %656 = vdwg.mxu0
        %657 = vmatpush.msra.mxu0 %v278
        %658 = vmatpush.msra.mxu0 %v275
        %659 = vmatpush.msra.mxu0 %v272
        %660 = vmatpush.msra.mxu0 %v269
        %661 = vmatpush.msra.mxu0 %v266
        %662 = vmatpush.msra.mxu0 %v263
        %663 = vmatpush.msra.mxu0 %v260
        %664 = vmatpush.msra.mxu0 %v257
        %665 = vmatpush.msra.mxu0 %v254
        %666 = vmatpush.msra.mxu0 %v251
        %667 = vmatpush.msra.mxu0 %v248
        %668 = vmatpush.msra.mxu0 %v245
        %669 = vmatpush.msra.mxu0 %v242
        %670 = vmatpush.msra.mxu0 %v239
        %671 = vmatpush.msra.mxu0 %v236
        %672 = vmatpush.msra.mxu0 %v233
        %673 = vmatmul.f32.gmra.mxu0 %v614
        %v674 = vpop.f32.mrf.mxu0
        %v675 = vadd.f32 %v286, %v674
        %676 = vdwg.mxu0
        %v679 = vrot.slane %v655, 7
        %v680 = vsel %vm353, %v635, %v679
        %v682 = vadd.f32 %v616, %v680
        %v683 = vxor.u32 %v682, 2147483648
        %v684 = vmul.f32 %v683, 1.442695
        %v685 = vpow.pop %v684
        %v686 = vadd.f32 %v685, 1.0
        %v687 = vrcp.pop %v686
        %v688 = vmul.f32 %v686, %v687
        %v689 = vsub.f32 1.0, %v688
        %v690 = vmul.f32 %v687, %v689
        %v691 = vadd.f32 %v687, %v690
        %vm692 = vweird.f32 %v686
        %vm693 = vweird.f32 %v687
        %vm694 = vmor %vm692, %vm693
        %v695 = vsel %vm694, %v687, %v691
        %v696 = vand.u32 2147483647, %v686
        %vm697 = vcmp.eq.f32.partialorder %v696, 8.507059e+37
        %v698 = vand.u32 %v686, 2147483648
        %v699 = vor.u32 1.1754944e-38, %v698
        %v700 = vsel %vm697, %v699, %v695
        %v701 = vmul.f32 1.0, %v700
        %v702 = vmul.f32 %v701, %v675
        %v704 = vrot.slane %v616, 2
        %v706 = vadd.f32 %v704, %v702
        %v707 = vtanh.pop %v706
        %v709 = vrot.slane %v701, 1
        %v711 = vsub.f32 1.0, %v709
        %v712 = vmul.f32 %v711, %v707
        %v713 = vmul.f32 %v709, %v614
        %v714 = vadd.f32 %v712, %v713
        %715 = vst [vmem:[%s216 + $0x3] sm:$0x1] %v714
        %s716 = sadd.s32 %s281, 3
        %p717 = scmp.lt.s32.totalorder %s716, %s224
        %s718 = scalar_select %p717, 1, 0
        %s719 = scvt.s32.f32 %s718
        %v720 = vsub.f32 %v714, %v614
        %v721 = vstv %s719
        %v722 = vmul.f32 %v721, %v720
        %v723 = vadd.f32 %v614, %v722
        %s724 = scalar_lea.vmem %s223, 4
        %v725 = vld [vmem:[%s724] ss:$8 sm:$0x7]
        %726 = vmatpush.msra.mxu0 %v276
        %727 = vmatpush.msra.mxu0 %v273
        %728 = vmatpush.msra.mxu0 %v270
        %729 = vmatpush.msra.mxu0 %v267
        %730 = vmatpush.msra.mxu0 %v264
        %731 = vmatpush.msra.mxu0 %v261
        %732 = vmatpush.msra.mxu0 %v258
        %733 = vmatpush.msra.mxu0 %v255
        %734 = vmatpush.msra.mxu0 %v252
        %735 = vmatpush.msra.mxu0 %v249
        %736 = vmatpush.msra.mxu0 %v246
        %737 = vmatpush.msra.mxu0 %v243
        %738 = vmatpush.msra.mxu0 %v240
        %739 = vmatpush.msra.mxu0 %v237
        %740 = vmatpush.msra.mxu0 %v234
        %741 = vmatpush.msra.mxu0 %v231
        %742 = vmatmul.f32.gmra.mxu0 %v723
        %v743 = vpop.f32.mrf.mxu0
        %v744 = vadd.f32 %v284, %v743
        %745 = vdwg.mxu0
        %746 = vmatpush.msra.mxu0 %v277
        %747 = vmatpush.msra.mxu0 %v274
        %748 = vmatpush.msra.mxu0 %v271
        %749 = vmatpush.msra.mxu0 %v268
        %750 = vmatpush.msra.mxu0 %v265
        %751 = vmatpush.msra.mxu0 %v262
        %752 = vmatpush.msra.mxu0 %v259
        %753 = vmatpush.msra.mxu0 %v256
        %754 = vmatpush.msra.mxu0 %v253
        %755 = vmatpush.msra.mxu0 %v250
        %756 = vmatpush.msra.mxu0 %v247
        %757 = vmatpush.msra.mxu0 %v244
        %758 = vmatpush.msra.mxu0 %v241
        %759 = vmatpush.msra.mxu0 %v238
        %760 = vmatpush.msra.mxu0 %v235
        %761 = vmatpush.msra.mxu0 %v232
        %762 = vmatmul.f32.gmra.mxu0 %v723
        %v763 = vpop.f32.mrf.mxu0
        %v764 = vadd.f32 %v285, %v763
        %765 = vdwg.mxu0
        %766 = vmatpush.msra.mxu0 %v278
        %767 = vmatpush.msra.mxu0 %v275
        %768 = vmatpush.msra.mxu0 %v272
        %769 = vmatpush.msra.mxu0 %v269
        %770 = vmatpush.msra.mxu0 %v266
        %771 = vmatpush.msra.mxu0 %v263
        %772 = vmatpush.msra.mxu0 %v260
        %773 = vmatpush.msra.mxu0 %v257
        %774 = vmatpush.msra.mxu0 %v254
        %775 = vmatpush.msra.mxu0 %v251
        %776 = vmatpush.msra.mxu0 %v248
        %777 = vmatpush.msra.mxu0 %v245
        %778 = vmatpush.msra.mxu0 %v242
        %779 = vmatpush.msra.mxu0 %v239
        %780 = vmatpush.msra.mxu0 %v236
        %781 = vmatpush.msra.mxu0 %v233
        %782 = vmatmul.f32.gmra.mxu0 %v723
        %v783 = vpop.f32.mrf.mxu0
        %v784 = vadd.f32 %v286, %v783
        %785 = vdwg.mxu0
        %v788 = vrot.slane %v764, 7
        %v789 = vsel %vm353, %v744, %v788
        %v791 = vadd.f32 %v725, %v789
        %v792 = vxor.u32 %v791, 2147483648
        %v793 = vmul.f32 %v792, 1.442695
        %v794 = vpow.pop %v793
        %v795 = vadd.f32 %v794, 1.0
        %v796 = vrcp.pop %v795
        %v797 = vmul.f32 %v795, %v796
        %v798 = vsub.f32 1.0, %v797
        %v799 = vmul.f32 %v796, %v798
        %v800 = vadd.f32 %v796, %v799
        %vm801 = vweird.f32 %v795
        %vm802 = vweird.f32 %v796
        %vm803 = vmor %vm801, %vm802
        %v804 = vsel %vm803, %v796, %v800
        %v805 = vand.u32 2147483647, %v795
        %vm806 = vcmp.eq.f32.partialorder %v805, 8.507059e+37
        %v807 = vand.u32 %v795, 2147483648
        %v808 = vor.u32 1.1754944e-38, %v807
        %v809 = vsel %vm806, %v808, %v804
        %v810 = vmul.f32 1.0, %v809
        %v811 = vmul.f32 %v810, %v784
        %v813 = vrot.slane %v725, 2
        %v815 = vadd.f32 %v813, %v811
        %v816 = vtanh.pop %v815
        %v818 = vrot.slane %v810, 1
        %v820 = vsub.f32 1.0, %v818
        %v821 = vmul.f32 %v820, %v816
        %v822 = vmul.f32 %v818, %v723
        %v823 = vadd.f32 %v821, %v822
        %824 = vst [vmem:[%s216 + $0x4] sm:$0x1] %v823
        %s825 = sadd.s32 %s281, 4
        %p826 = scmp.lt.s32.totalorder %s825, %s224
        %s827 = scalar_select %p826, 1, 0
        %s828 = scvt.s32.f32 %s827
        %v829 = vsub.f32 %v823, %v723
        %v830 = vstv %s828
        %v831 = vmul.f32 %v830, %v829
        %v832 = vadd.f32 %v723, %v831
        %s833 = scalar_lea.vmem %s223, 5
        %v834 = vld [vmem:[%s833] ss:$8 sm:$0x7]
        %835 = vmatpush.msra.mxu0 %v276
        %836 = vmatpush.msra.mxu0 %v273
        %837 = vmatpush.msra.mxu0 %v270
        %838 = vmatpush.msra.mxu0 %v267
        %839 = vmatpush.msra.mxu0 %v264
        %840 = vmatpush.msra.mxu0 %v261
        %841 = vmatpush.msra.mxu0 %v258
        %842 = vmatpush.msra.mxu0 %v255
        %843 = vmatpush.msra.mxu0 %v252
        %844 = vmatpush.msra.mxu0 %v249
        %845 = vmatpush.msra.mxu0 %v246
        %846 = vmatpush.msra.mxu0 %v243
        %847 = vmatpush.msra.mxu0 %v240
        %848 = vmatpush.msra.mxu0 %v237
        %849 = vmatpush.msra.mxu0 %v234
        %850 = vmatpush.msra.mxu0 %v231
        %851 = vmatmul.f32.gmra.mxu0 %v832
        %v852 = vpop.f32.mrf.mxu0
        %v853 = vadd.f32 %v284, %v852
        %854 = vdwg.mxu0
        %855 = vmatpush.msra.mxu0 %v277
        %856 = vmatpush.msra.mxu0 %v274
        %857 = vmatpush.msra.mxu0 %v271
        %858 = vmatpush.msra.mxu0 %v268
        %859 = vmatpush.msra.mxu0 %v265
        %860 = vmatpush.msra.mxu0 %v262
        %861 = vmatpush.msra.mxu0 %v259
        %862 = vmatpush.msra.mxu0 %v256
        %863 = vmatpush.msra.mxu0 %v253
        %864 = vmatpush.msra.mxu0 %v250
        %865 = vmatpush.msra.mxu0 %v247
        %866 = vmatpush.msra.mxu0 %v244
        %867 = vmatpush.msra.mxu0 %v241
        %868 = vmatpush.msra.mxu0 %v238
        %869 = vmatpush.msra.mxu0 %v235
        %870 = vmatpush.msra.mxu0 %v232
        %871 = vmatmul.f32.gmra.mxu0 %v832
        %v872 = vpop.f32.mrf.mxu0
        %v873 = vadd.f32 %v285, %v872
        %874 = vdwg.mxu0
        %875 = vmatpush.msra.mxu0 %v278
        %876 = vmatpush.msra.mxu0 %v275
        %877 = vmatpush.msra.mxu0 %v272
        %878 = vmatpush.msra.mxu0 %v269
        %879 = vmatpush.msra.mxu0 %v266
        %880 = vmatpush.msra.mxu0 %v263
        %881 = vmatpush.msra.mxu0 %v260
        %882 = vmatpush.msra.mxu0 %v257
        %883 = vmatpush.msra.mxu0 %v254
        %884 = vmatpush.msra.mxu0 %v251
        %885 = vmatpush.msra.mxu0 %v248
        %886 = vmatpush.msra.mxu0 %v245
        %887 = vmatpush.msra.mxu0 %v242
        %888 = vmatpush.msra.mxu0 %v239
        %889 = vmatpush.msra.mxu0 %v236
        %890 = vmatpush.msra.mxu0 %v233
        %891 = vmatmul.f32.gmra.mxu0 %v832
        %v892 = vpop.f32.mrf.mxu0
        %v893 = vadd.f32 %v286, %v892
        %894 = vdwg.mxu0
        %v897 = vrot.slane %v873, 7
        %v898 = vsel %vm353, %v853, %v897
        %v900 = vadd.f32 %v834, %v898
        %v901 = vxor.u32 %v900, 2147483648
        %v902 = vmul.f32 %v901, 1.442695
        %v903 = vpow.pop %v902
        %v904 = vadd.f32 %v903, 1.0
        %v905 = vrcp.pop %v904
        %v906 = vmul.f32 %v904, %v905
        %v907 = vsub.f32 1.0, %v906
        %v908 = vmul.f32 %v905, %v907
        %v909 = vadd.f32 %v905, %v908
        %vm910 = vweird.f32 %v904
        %vm911 = vweird.f32 %v905
        %vm912 = vmor %vm910, %vm911
        %v913 = vsel %vm912, %v905, %v909
        %v914 = vand.u32 2147483647, %v904
        %vm915 = vcmp.eq.f32.partialorder %v914, 8.507059e+37
        %v916 = vand.u32 %v904, 2147483648
        %v917 = vor.u32 1.1754944e-38, %v916
        %v918 = vsel %vm915, %v917, %v913
        %v919 = vmul.f32 1.0, %v918
        %v920 = vmul.f32 %v919, %v893
        %v922 = vrot.slane %v834, 2
        %v924 = vadd.f32 %v922, %v920
        %v925 = vtanh.pop %v924
        %v927 = vrot.slane %v919, 1
        %v929 = vsub.f32 1.0, %v927
        %v930 = vmul.f32 %v929, %v925
        %v931 = vmul.f32 %v927, %v832
        %v932 = vadd.f32 %v930, %v931
        %933 = vst [vmem:[%s216 + $0x5] sm:$0x1] %v932
        %s934 = sadd.s32 %s281, 5
        %p935 = scmp.lt.s32.totalorder %s934, %s224
        %s936 = scalar_select %p935, 1, 0
        %s937 = scvt.s32.f32 %s936
        %v938 = vsub.f32 %v932, %v832
        %v939 = vstv %s937
        %v940 = vmul.f32 %v939, %v938
        %v941 = vadd.f32 %v832, %v940
        %s942 = scalar_lea.vmem %s223, 6
        %v943 = vld [vmem:[%s942] ss:$8 sm:$0x7]
        %944 = vmatpush.msra.mxu0 %v276
        %945 = vmatpush.msra.mxu0 %v273
        %946 = vmatpush.msra.mxu0 %v270
        %947 = vmatpush.msra.mxu0 %v267
        %948 = vmatpush.msra.mxu0 %v264
        %949 = vmatpush.msra.mxu0 %v261
        %950 = vmatpush.msra.mxu0 %v258
        %951 = vmatpush.msra.mxu0 %v255
        %952 = vmatpush.msra.mxu0 %v252
        %953 = vmatpush.msra.mxu0 %v249
        %954 = vmatpush.msra.mxu0 %v246
        %955 = vmatpush.msra.mxu0 %v243
        %956 = vmatpush.msra.mxu0 %v240
        %957 = vmatpush.msra.mxu0 %v237
        %958 = vmatpush.msra.mxu0 %v234
        %959 = vmatpush.msra.mxu0 %v231
        %960 = vmatmul.f32.gmra.mxu0 %v941
        %v961 = vpop.f32.mrf.mxu0
        %v962 = vadd.f32 %v284, %v961
        %963 = vdwg.mxu0
        %964 = vmatpush.msra.mxu0 %v277
        %965 = vmatpush.msra.mxu0 %v274
        %966 = vmatpush.msra.mxu0 %v271
        %967 = vmatpush.msra.mxu0 %v268
        %968 = vmatpush.msra.mxu0 %v265
        %969 = vmatpush.msra.mxu0 %v262
        %970 = vmatpush.msra.mxu0 %v259
        %971 = vmatpush.msra.mxu0 %v256
        %972 = vmatpush.msra.mxu0 %v253
        %973 = vmatpush.msra.mxu0 %v250
        %974 = vmatpush.msra.mxu0 %v247
        %975 = vmatpush.msra.mxu0 %v244
        %976 = vmatpush.msra.mxu0 %v241
        %977 = vmatpush.msra.mxu0 %v238
        %978 = vmatpush.msra.mxu0 %v235
        %979 = vmatpush.msra.mxu0 %v232
        %980 = vmatmul.f32.gmra.mxu0 %v941
        %v981 = vpop.f32.mrf.mxu0
        %v982 = vadd.f32 %v285, %v981
        %983 = vdwg.mxu0
        %984 = vmatpush.msra.mxu0 %v278
        %985 = vmatpush.msra.mxu0 %v275
        %986 = vmatpush.msra.mxu0 %v272
        %987 = vmatpush.msra.mxu0 %v269
        %988 = vmatpush.msra.mxu0 %v266
        %989 = vmatpush.msra.mxu0 %v263
        %990 = vmatpush.msra.mxu0 %v260
        %991 = vmatpush.msra.mxu0 %v257
        %992 = vmatpush.msra.mxu0 %v254
        %993 = vmatpush.msra.mxu0 %v251
        %994 = vmatpush.msra.mxu0 %v248
        %995 = vmatpush.msra.mxu0 %v245
        %996 = vmatpush.msra.mxu0 %v242
        %997 = vmatpush.msra.mxu0 %v239
        %998 = vmatpush.msra.mxu0 %v236
        %999 = vmatpush.msra.mxu0 %v233
        %1000 = vmatmul.f32.gmra.mxu0 %v941
        %v1001 = vpop.f32.mrf.mxu0
        %v1002 = vadd.f32 %v286, %v1001
        %1003 = vdwg.mxu0
        %v1006 = vrot.slane %v982, 7
        %v1007 = vsel %vm353, %v962, %v1006
        %v1009 = vadd.f32 %v943, %v1007
        %v1010 = vxor.u32 %v1009, 2147483648
        %v1011 = vmul.f32 %v1010, 1.442695
        %v1012 = vpow.pop %v1011
        %v1013 = vadd.f32 %v1012, 1.0
        %v1014 = vrcp.pop %v1013
        %v1015 = vmul.f32 %v1013, %v1014
        %v1016 = vsub.f32 1.0, %v1015
        %v1017 = vmul.f32 %v1014, %v1016
        %v1018 = vadd.f32 %v1014, %v1017
        %vm1019 = vweird.f32 %v1013
        %vm1020 = vweird.f32 %v1014
        %vm1021 = vmor %vm1019, %vm1020
        %v1022 = vsel %vm1021, %v1014, %v1018
        %v1023 = vand.u32 2147483647, %v1013
        %vm1024 = vcmp.eq.f32.partialorder %v1023, 8.507059e+37
        %v1025 = vand.u32 %v1013, 2147483648
        %v1026 = vor.u32 1.1754944e-38, %v1025
        %v1027 = vsel %vm1024, %v1026, %v1022
        %v1028 = vmul.f32 1.0, %v1027
        %v1029 = vmul.f32 %v1028, %v1002
        %v1031 = vrot.slane %v943, 2
        %v1033 = vadd.f32 %v1031, %v1029
        %v1034 = vtanh.pop %v1033
        %v1036 = vrot.slane %v1028, 1
        %v1038 = vsub.f32 1.0, %v1036
        %v1039 = vmul.f32 %v1038, %v1034
        %v1040 = vmul.f32 %v1036, %v941
        %v1041 = vadd.f32 %v1039, %v1040
        %1042 = vst [vmem:[%s216 + $0x6] sm:$0x1] %v1041
        %s1043 = sadd.s32 %s281, 6
        %p1044 = scmp.lt.s32.totalorder %s1043, %s224
        %s1045 = scalar_select %p1044, 1, 0
        %s1046 = scvt.s32.f32 %s1045
        %v1047 = vsub.f32 %v1041, %v941
        %v1048 = vstv %s1046
        %v1049 = vmul.f32 %v1048, %v1047
        %v1050 = vadd.f32 %v941, %v1049
        %s1051 = scalar_lea.vmem %s223, 7
        %v1052 = vld [vmem:[%s1051] ss:$8 sm:$0x7]
        %1053 = vmatpush.msra.mxu0 %v276
        %1054 = vmatpush.msra.mxu0 %v273
        %1055 = vmatpush.msra.mxu0 %v270
        %1056 = vmatpush.msra.mxu0 %v267
        %1057 = vmatpush.msra.mxu0 %v264
        %1058 = vmatpush.msra.mxu0 %v261
        %1059 = vmatpush.msra.mxu0 %v258
        %1060 = vmatpush.msra.mxu0 %v255
        %1061 = vmatpush.msra.mxu0 %v252
        %1062 = vmatpush.msra.mxu0 %v249
        %1063 = vmatpush.msra.mxu0 %v246
        %1064 = vmatpush.msra.mxu0 %v243
        %1065 = vmatpush.msra.mxu0 %v240
        %1066 = vmatpush.msra.mxu0 %v237
        %1067 = vmatpush.msra.mxu0 %v234
        %1068 = vmatpush.msra.mxu0 %v231
        %1069 = vmatmul.f32.gmra.mxu0 %v1050
        %v1070 = vpop.f32.mrf.mxu0
        %v1071 = vadd.f32 %v284, %v1070
        %1072 = vdwg.mxu0
        %1073 = vmatpush.msra.mxu0 %v277
        %1074 = vmatpush.msra.mxu0 %v274
        %1075 = vmatpush.msra.mxu0 %v271
        %1076 = vmatpush.msra.mxu0 %v268
        %1077 = vmatpush.msra.mxu0 %v265
        %1078 = vmatpush.msra.mxu0 %v262
        %1079 = vmatpush.msra.mxu0 %v259
        %1080 = vmatpush.msra.mxu0 %v256
        %1081 = vmatpush.msra.mxu0 %v253
        %1082 = vmatpush.msra.mxu0 %v250
        %1083 = vmatpush.msra.mxu0 %v247
        %1084 = vmatpush.msra.mxu0 %v244
        %1085 = vmatpush.msra.mxu0 %v241
        %1086 = vmatpush.msra.mxu0 %v238
        %1087 = vmatpush.msra.mxu0 %v235
        %1088 = vmatpush.msra.mxu0 %v232
        %1089 = vmatmul.f32.gmra.mxu0 %v1050
        %v1090 = vpop.f32.mrf.mxu0
        %v1091 = vadd.f32 %v285, %v1090
        %1092 = vdwg.mxu0
        %1093 = vmatpush.msra.mxu0 %v278
        %1094 = vmatpush.msra.mxu0 %v275
        %1095 = vmatpush.msra.mxu0 %v272
        %1096 = vmatpush.msra.mxu0 %v269
        %1097 = vmatpush.msra.mxu0 %v266
        %1098 = vmatpush.msra.mxu0 %v263
        %1099 = vmatpush.msra.mxu0 %v260
        %1100 = vmatpush.msra.mxu0 %v257
        %1101 = vmatpush.msra.mxu0 %v254
        %1102 = vmatpush.msra.mxu0 %v251
        %1103 = vmatpush.msra.mxu0 %v248
        %1104 = vmatpush.msra.mxu0 %v245
        %1105 = vmatpush.msra.mxu0 %v242
        %1106 = vmatpush.msra.mxu0 %v239
        %1107 = vmatpush.msra.mxu0 %v236
        %1108 = vmatpush.msra.mxu0 %v233
        %1109 = vmatmul.f32.gmra.mxu0 %v1050
        %v1110 = vpop.f32.mrf.mxu0
        %v1111 = vadd.f32 %v286, %v1110
        %1112 = vdwg.mxu0
        %v1115 = vrot.slane %v1091, 7
        %v1116 = vsel %vm353, %v1071, %v1115
        %v1118 = vadd.f32 %v1052, %v1116
        %v1119 = vxor.u32 %v1118, 2147483648
        %v1120 = vmul.f32 %v1119, 1.442695
        %v1121 = vpow.pop %v1120
        %v1122 = vadd.f32 %v1121, 1.0
        %v1123 = vrcp.pop %v1122
        %v1124 = vmul.f32 %v1122, %v1123
        %v1125 = vsub.f32 1.0, %v1124
        %v1126 = vmul.f32 %v1123, %v1125
        %v1127 = vadd.f32 %v1123, %v1126
        %vm1128 = vweird.f32 %v1122
        %vm1129 = vweird.f32 %v1123
        %vm1130 = vmor %vm1128, %vm1129
        %v1131 = vsel %vm1130, %v1123, %v1127
        %v1132 = vand.u32 2147483647, %v1122
        %vm1133 = vcmp.eq.f32.partialorder %v1132, 8.507059e+37
        %v1134 = vand.u32 %v1122, 2147483648
        %v1135 = vor.u32 1.1754944e-38, %v1134
        %v1136 = vsel %vm1133, %v1135, %v1131
        %v1137 = vmul.f32 1.0, %v1136
        %v1138 = vmul.f32 %v1137, %v1111
        %v1140 = vrot.slane %v1052, 2
        %v1142 = vadd.f32 %v1140, %v1138
        %v1143 = vtanh.pop %v1142
        %v1145 = vrot.slane %v1137, 1
        %v1147 = vsub.f32 1.0, %v1145
        %v1148 = vmul.f32 %v1147, %v1143
        %v1149 = vmul.f32 %v1145, %v1050
        %v1150 = vadd.f32 %v1148, %v1149
        %1151 = vst [vmem:[%s216 + $0x7] sm:$0x1] %v1150
        %s1152 = sadd.s32 %s281, 7
        %p1153 = scmp.lt.s32.totalorder %s1152, %s224
        %s1154 = scalar_select %p1153, 1, 0
        %s1155 = scvt.s32.f32 %s1154
        %v1156 = vsub.f32 %v1150, %v1050
        %v1157 = vstv %s1155
        %v1158 = vmul.f32 %v1157, %v1156
        %v1159 = vadd.f32 %v1050, %v1158
        %1160 = vst [vmem:[#allocation6] sm:$0x1] %v1159
        %s1161 = sand.u32 %s120, 1
        %s1162 = scalar_lea.sflag [#allocation5], %s1161
        %s1163 = sand.u32 %s120, 1
        %s1164 = smul.addr %s1163, 8
        %s1165 = scalar_lea.vmem [#allocation4], %s1164
        // Predicated region
        $region41: #{_encoder_gru_bucketed.1} parent=35 // pred_check
          %p1166 = pneg %p130
        $region42: #{_encoder_gru_bucketed.1} parent=35 // pred_check_branch
          %1168 = sbr.rel (%p1166) target = $region44
        $region43: #{_encoder_gru_bucketed.1} parent=35 // pred_region
          %1170 = vsyncadd %s1162, 0
          %s1171 = smul.addr %s23, 8
          %s1172 = scalar_lea.hbm %s5, %s1171
          %s1174 = sshll.u32 %s1165, 4
          %s1175 = int_to_ptr.vmem [resolvable:$true] %s1174
          %s1176 = sshll.u32 %s1172, 4
          %s1177 = int_to_ptr.hbm [resolvable:$true] %s1176
          %1179 = dma.vmem_to_hbm [thread:$0]  %s1175, 128, %s1177, %s1162
        $region44: #{_encoder_gru_bucketed.1} parent=35 // pred_fallthru
          _
        // Predicated region
        $region45: #{_encoder_gru_bucketed.1} parent=35 // pred_check
          %p1180 = pneg %p151
        $region46: #{_encoder_gru_bucketed.1} parent=35 // pred_check_branch
          %1182 = sbr.rel (%p1180) target = $region48
        $region47: #{_encoder_gru_bucketed.1} parent=35 // pred_region
          %1184 = vsyncadd [#allocation7], 0
          %s1186 = sshll.u32 [#allocation6], 4
          %s1187 = int_to_ptr.vmem [resolvable:$true] %s1186
          %s1188 = sshll.u32 %s6, 4
          %s1189 = int_to_ptr.hbm [resolvable:$true] %s1188
          %1191 = dma.vmem_to_hbm [thread:$0]  %s1187, 16, %s1189, [#allocation7]
        $region48: #{_encoder_gru_bucketed.1} parent=35 // pred_fallthru
          _
        // Predicated region
        $region49: #{_encoder_gru_bucketed.1} parent=35 // pred_check
          %p1192 = pneg %p151
        $region50: #{_encoder_gru_bucketed.1} parent=35 // pred_check_branch
          %1194 = sbr.rel (%p1192) target = $region52
        $region51: #{_encoder_gru_bucketed.1} parent=35 // pred_region
          %1196 = dma.done [#allocation7], 16
        $region52: #{_encoder_gru_bucketed.1} parent=35 // pred_fallthru
          _
      $region36: #{_encoder_gru_bucketed.1} parent=5 // pred_fallthru
        _
      %p1197 = scmp.le.s32.totalorder 2, %s18
      // Predicated region
      $region53: #{_encoder_gru_bucketed.1} parent=5 // pred_check
        %p1198 = pneg %p1197
      $region54: #{_encoder_gru_bucketed.1} parent=5 // pred_check_branch
        %1200 = sbr.rel (%p1198) target = $region56
      $region55: #{_encoder_gru_bucketed.1} parent=5 // pred_region
        %s1201 = ssub.s32 %s18, 2
        // Predicated region
        $region57: #{_encoder_gru_bucketed.1} parent=55 // pred_check
          %p1202 = pneg %p136
        $region58: #{_encoder_gru_bucketed.1} parent=55 // pred_check_branch
          %1204 = sbr.rel (%p1202) target = $region60
        $region59: #{_encoder_gru_bucketed.1} parent=55 // pred_region
          %s1205 = sand.u32 %s121, 1
          %s1206 = scalar_lea.sflag [#allocation5], %s1205
          %s1207 = sand.u32 %s121, 1
          %s1208 = smul.addr %s1207, 8
          %s1209 = scalar_lea.vmem [#allocation4], %s1208
          %1211 = dma.done %s1206, 128
        $region60: #{_encoder_gru_bucketed.1} parent=55 // pred_fallthru
          _
      $region56: #{_encoder_gru_bucketed.1} parent=5 // pred_fallthru
        _
    $region6: #{_encoder_gru_bucketed.1} parent=1 // loop_footer
      %s22 = sadd.s32 1, %s18
    $region7: #{_encoder_gru_bucketed.1} parent=1 // loop_footer_branch
      %17 = sbr.rel target = $region3
    $region8: #{_encoder_gru_bucketed.1} parent=1 // loop_exit
      _
    %1212 = vsyncpa [#allocation5], 1
    %s1213 = scalar_lea.sflag [#allocation5], 1
    %1214 = vsyncpa %s1213, 1
    %1215 = vsyncpa [#allocation7], 1

</llo_original>
